<compile_context>
chip_gen: v7x
topology: tpu7x:2x2x1
jax: 0.10.0
libtpu: 0.0.40
codegen_flags: <defaults>
</compile_context>

<pallas_src>
import functools

import jax
import jax.numpy as jnp
from jax.experimental import pallas as pl
from jax.experimental.pallas import tpu as pltpu


_DOT_PREC = jax.lax.Precision.DEFAULT    # bf16 MXU inputs, f32 accumulate (explicit)
_HI_PREC = jax.lax.Precision.HIGHEST     # exact f32 for tiny wrapper-side matmuls


# ---------------------------------------------------------------------------
# Kernels
# ---------------------------------------------------------------------------

def _accumulate_tile_max(h, t, n_points, o_ref, acc_ref):
    """Mask ragged lanes, fold (H, tn) tile into a (H, 128) running max, and
    write the fully-reduced (H, 1) result once at the last point tile."""
    tn = h.shape[1]
    if n_points % tn != 0:
        # only the last tile has lanes >= n_points; masking to 0 is exact since
        # every valid value is post-ReLU >= 0 (OOB block contents are undefined).
        lane = jax.lax.broadcasted_iota(jnp.int32, h.shape, 1)
        h = jnp.where(t * tn + lane < n_points, h, 0.0)

    # element-wise (VPU-only) fold of the tile into 128 lanes; the cross-lane
    # XLU reduce is deferred to once per batch.
    m = h[:, 0:128]
    for i in range(1, tn // 128):
        m = jnp.maximum(m, h[:, i * 128:(i + 1) * 128])

    @pl.when(t == 0)
    def _():
        acc_ref[...] = m

    @pl.when(t != 0)
    def _():
        acc_ref[...] = jnp.maximum(acc_ref[...], m)

    @pl.when(t == pl.num_programs(1) - 1)
    def _():
        o_ref[...] = jnp.max(acc_ref[...], axis=1, keepdims=True)[None]


def _stn_conv_max_kernel(n_points, x_ref, w1_ref, b1_ref, w2_ref, b2_ref,
                         w3_ref, b3_ref, o_ref, acc_ref):
    """STN per-point MLP (3->16->32->64) + running max over point tiles."""
    t = pl.program_id(1)
    sp = x_ref[0, :3, :]                                           # (3, TN)
    h = jnp.dot(w1_ref[...], sp, precision=_DOT_PREC,
                preferred_element_type=jnp.float32) + b1_ref[...]
    h = jnp.maximum(h, 0.0)
    h = jnp.dot(w2_ref[...], h, precision=_DOT_PREC,
                preferred_element_type=jnp.float32) + b2_ref[...]
    h = jnp.maximum(h, 0.0)
    h = jnp.dot(w3_ref[...], h, precision=_DOT_PREC,
                preferred_element_type=jnp.float32) + b3_ref[...]
    h = jnp.maximum(h, 0.0)                                        # (H, TN)
    _accumulate_tile_max(h, t, n_points, o_ref, acc_ref)


def _main_conv_max_kernel(n_points, x_ref, w1s_ref, w1o_ref, b1_ref,
                          w2_ref, b2_ref, w3_ref, b3_ref, o_ref, acc_ref):
    """Main per-point MLP (6->16->32->64) + running max.

    The bmm with `trans` is pre-folded into the per-batch spatial weight
    w1s_ref (B,16,3); the settings concat is pre-folded into the per-batch
    conv3 bias b3_ref (B,64,1)."""
    t = pl.program_id(1)
    sp = x_ref[0, :3, :]                                           # (3, TN)
    ot = x_ref[0, 3:, :]                                           # (C-3, TN)
    h = (jnp.dot(w1s_ref[0], sp, precision=_DOT_PREC,
                 preferred_element_type=jnp.float32)
         + jnp.dot(w1o_ref[...], ot, precision=_DOT_PREC,
                   preferred_element_type=jnp.float32)
         + b1_ref[...])
    h = jnp.maximum(h, 0.0)
    h = jnp.dot(w2_ref[...], h, precision=_DOT_PREC,
                preferred_element_type=jnp.float32) + b2_ref[...]
    h = jnp.maximum(h, 0.0)
    h = jnp.dot(w3_ref[...], h, precision=_DOT_PREC,
                preferred_element_type=jnp.float32) + b3_ref[0]
    h = jnp.maximum(h, 0.0)                                        # (H, TN)
    _accumulate_tile_max(h, t, n_points, o_ref, acc_ref)


# ---------------------------------------------------------------------------
# Wrapper
# ---------------------------------------------------------------------------

@functools.partial(jax.jit, static_argnames=("tile_n",))
def pointnet_feat_forward(x, settings, params, *, tile_n=4096):
    """x: (B, input_dim, N); settings: (B, settings_dim).

    Returns (global_feature (B, hidden), trans (B, 3, 3), None).
    """
    B, c_in, N = x.shape
    x = x.astype(jnp.float32)
    settings = settings.astype(jnp.float32)

    sw1, sb1, sw2, sb2, sw3, sb3 = params["stn_conv"]
    fw1, fb1, fw2, fb2, fw3, fb3 = params["stn_head"]
    mw1s, mw1o, mb1, mw2, mb2, mw3x, mw3s, mb3 = params["main_conv"]
    hidden = sw3.shape[0]

    # lane-dense point tiles (multiple of 128), saturating toward padded N
    n_pad128 = pl.cdiv(N, 128) * 128
    tn = min(pl.cdiv(tile_n, 128) * 128, n_pad128)
    n_tiles = pl.cdiv(N, tn)

    # NOTE(v7x): with B >= 2 the "parallel" batch axis spans both TensorCores;
    # for B == 1 a leading 2-way split of the point range would be needed.
    dim_sem = pltpu.CompilerParams(
        dimension_semantics=("parallel", "arbitrary"))
    full = lambda b, t: (0, 0)
    per_batch = lambda b, t: (b, 0, 0)
    x_map = lambda b, t: (b, 0, t)

    # ---- 1) STN point-MLP + global max over points -------------------------
    stn_max = pl.pallas_call(
        functools.partial(_stn_conv_max_kernel, N),
        out_shape=jax.ShapeDtypeStruct((B, hidden, 1), jnp.float32),
        grid_spec=pltpu.PrefetchScalarGridSpec(
            num_scalar_prefetch=0,
            grid=(B, n_tiles),
            in_specs=[
                pl.BlockSpec((1, c_in, tn), x_map),
                pl.BlockSpec(sw1.shape, full), pl.BlockSpec(sb1.shape, full),
                pl.BlockSpec(sw2.shape, full), pl.BlockSpec(sb2.shape, full),
                pl.BlockSpec(sw3.shape, full), pl.BlockSpec(sb3.shape, full),
            ],
            out_specs=pl.BlockSpec((1, hidden, 1), per_batch),
            scratch_shapes=[pltpu.VMEM((hidden, 128), jnp.float32)],
        ),
        compiler_params=dim_sem,
        cost_estimate=pl.CostEstimate(
            flops=2 * B * n_tiles * tn * (sw1.size + sw2.size + sw3.size),
            transcendentals=0,
            bytes_accessed=4 * (B * c_in * N + B * hidden)),
    )(x, sw1, sb1, sw2, sb2, sw3, sb3)

    # ---- 2) STN FC head + per-batch constant folding (plain XLA, tiny) -----
    g = stn_max[:, :, 0]                                            # (B, hidden)
    h = jax.nn.relu(jnp.dot(g, fw1, precision=_HI_PREC) + fb1)
    h = jax.nn.relu(jnp.dot(h, fw2, precision=_HI_PREC) + fb2)
    trans = (jnp.dot(h, fw3, precision=_HI_PREC) + fb3).reshape(B, 3, 3)

    # fold bmm(spatial, trans) into conv1's spatial weight (per batch)
    w1s_eff = jnp.einsum("ok,bck->boc", mw1s, trans,
                         precision=_HI_PREC)                        # (B, C1, 3)
    # fold the settings concat into conv3's bias (per batch)
    b3_eff = mb3[None] + jnp.einsum("os,bs->bo", mw3s, settings,
                                    precision=_HI_PREC)[..., None]  # (B, H, 1)

    # ---- 3) main point-MLP + global max over points -------------------------
    gmax = pl.pallas_call(
        functools.partial(_main_conv_max_kernel, N),
        out_shape=jax.ShapeDtypeStruct((B, hidden, 1), jnp.float32),
        grid_spec=pltpu.PrefetchScalarGridSpec(
            num_scalar_prefetch=0,
            grid=(B, n_tiles),
            in_specs=[
                pl.BlockSpec((1, c_in, tn), x_map),
                pl.BlockSpec((1,) + mw1s.shape, per_batch),         # (1, C1, 3)
                pl.BlockSpec(mw1o.shape, full), pl.BlockSpec(mb1.shape, full),
                pl.BlockSpec(mw2.shape, full), pl.BlockSpec(mb2.shape, full),
                pl.BlockSpec(mw3x.shape, full),
                pl.BlockSpec((1, hidden, 1), per_batch),             # b3_eff
            ],
            out_specs=pl.BlockSpec((1, hidden, 1), per_batch),
            scratch_shapes=[pltpu.VMEM((hidden, 128), jnp.float32)],
        ),
        compiler_params=dim_sem,
        cost_estimate=pl.CostEstimate(
            flops=2 * B * n_tiles * tn * (mw1s.size + mw1o.size
                                          + mw2.size + mw3x.size),
            transcendentals=0,
            bytes_accessed=4 * (B * c_in * N + B * hidden)),
    )(x, w1s_eff, mw1o, mb1, mw2, mb2, mw3x, b3_eff)

    return gmax[:, :, 0], trans, None


# ---------------------------------------------------------------------------
# Parameter construction (synthetic, deterministic) + BN folding
# ---------------------------------------------------------------------------

def _uniform(key, shape, limit):
    return jax.random.uniform(key, shape, jnp.float32, -limit, limit)


def _conv_or_linear(key, c_in, c_out):
    k1, k2 = jax.random.split(key)
    lim = 1.0 / (c_in ** 0.5)
    return _uniform(k1, (c_out, c_in), lim), _uniform(k2, (c_out,), lim)


def _bn(key, c):
    k1, k2, k3, k4 = jax.random.split(key, 4)
    gamma = jax.random.uniform(k1, (c,), jnp.float32, 0.5, 1.5)
    beta = 0.1 * jax.random.normal(k2, (c,), jnp.float32)
    mean = 0.1 * jax.random.normal(k3, (c,), jnp.float32)
    var = jax.random.uniform(k4, (c,), jnp.float32, 0.5, 1.5)
    return gamma, beta, mean, var


def init_raw_params(key, input_dim=6, settings_dim=6, hidden_dim=64, k=3):
    h = hidden_dim
    ks = jax.random.split(key, 17)
    stn = dict(
        c1=_conv_or_linear(ks[0], k, h // 4),       bn1=_bn(ks[1], h // 4),
        c2=_conv_or_linear(ks[2], h // 4, h // 2),  bn2=_bn(ks[3], h // 2),
        c3=_conv_or_linear(ks[4], h // 2, h),       bn3=_bn(ks[5], h),
        f1=_conv_or_linear(ks[6], h, h),            bn4=_bn(ks[7], h),
        f2=_conv_or_linear(ks[8], h, h // 2),       bn5=_bn(ks[9], h // 2),
        f3=_conv_or_linear(ks[10], h // 2, k * k),
    )
    main = dict(
        c1=_conv_or_linear(ks[11], input_dim, h // 4),        bn1=_bn(ks[12], h // 4),
        c2=_conv_or_linear(ks[13], h // 4, h // 2),            bn2=_bn(ks[14], h // 2),
        c3=_conv_or_linear(ks[15], h // 2 + settings_dim, h),  bn3=_bn(ks[16], h),
    )
    return dict(stn=stn, main=main)


def _fold(layer, bn_p, eps=1e-5):
    w, b = layer
    gamma, beta, mean, var = bn_p
    scale = gamma / jnp.sqrt(var + eps)
    return w * scale[:, None], (b - mean) * scale + beta


def fold_params(raw, k=3):
    """Fold inference-mode BN into weights and re-layout for the kernels."""
    stn, main = raw["stn"], raw["main"]

    sw1, sb1 = _fold(stn["c1"], stn["bn1"])
    sw2, sb2 = _fold(stn["c2"], stn["bn2"])
    sw3, sb3 = _fold(stn["c3"], stn["bn3"])

    fw1, fb1 = _fold(stn["f1"], stn["bn4"])
    fw2, fb2 = _fold(stn["f2"], stn["bn5"])
    fw3, fb3 = stn["f3"]
    fb3 = fb3 + jnp.eye(k, dtype=jnp.float32).flatten()      # identity folded into bias

    mw1, mb1 = _fold(main["c1"], main["bn1"])
    mw2, mb2 = _fold(main["c2"], main["bn2"])
    mw3, mb3 = _fold(main["c3"], main["bn3"])
    c2_out = mw2.shape[0]

    return dict(
        # conv weights (C_out, C_in); biases (C_out, 1) lane-broadcastable
        stn_conv=(sw1, sb1[:, None], sw2, sb2[:, None], sw3, sb3[:, None]),
        # fc head (computed in XLA): weights pre-transposed (in, out), biases (out,)
        stn_head=(fw1.T, fb1, fw2.T, fb2, fw3.T, fb3),
        # main conv1/conv3 split so the kernel never concatenates channels
        main_conv=(mw1[:, :k], mw1[:, k:], mb1[:, None],
                   mw2, mb2[:, None],
                   mw3[:, :c2_out], mw3[:, c2_out:], mb3[:, None]),
    )


# ---------------------------------------------------------------------------
# Pure-JAX reference (raw, unfolded params; exact f32)
# ---------------------------------------------------------------------------

def _bn_apply(x, bn_p, eps=1e-5):
    gamma, beta, mean, var = bn_p
    shape = (1, -1, 1) if x.ndim == 3 else (1, -1)
    return ((x - mean.reshape(shape)) / jnp.sqrt(var.reshape(shape) + eps)
            * gamma.reshape(shape) + beta.reshape(shape))


def _conv1(x, layer):
    w, b = layer
    return jnp.einsum("oc,bcn->bon", w, x, precision=_HI_PREC) + b[None, :, None]


def _linear(x, layer):
    w, b = layer
    return jnp.dot(x, w.T, precision=_HI_PREC) + b[None, :]


def pointnet_feat_reference(x, settings, raw, k=3):
    B, _, N = x.shape
    stn, main = raw["stn"], raw["main"]
    sp, ot = x[:, :k, :], x[:, k:, :]

    h = jax.nn.relu(_bn_apply(_conv1(sp, stn["c1"]), stn["bn1"]))
    h = jax.nn.relu(_bn_apply(_conv1(h, stn["c2"]), stn["bn2"]))
    h = jax.nn.relu(_bn_apply(_conv1(h, stn["c3"]), stn["bn3"]))
    h = jnp.max(h, axis=2)
    h = jax.nn.relu(_bn_apply(_linear(h, stn["f1"]), stn["bn4"]))
    h = jax.nn.relu(_bn_apply(_linear(h, stn["f2"]), stn["bn5"]))
    trans = (_linear(h, stn["f3"]) + jnp.eye(k).flatten()[None]).reshape(B, k, k)

    sp_t = jnp.einsum("bcn,bck->bkn", sp, trans, precision=_HI_PREC)
    h = jnp.concatenate([sp_t, ot], axis=1)
    h = jax.nn.relu(_bn_apply(_conv1(h, main["c1"]), main["bn1"]))
    h = jax.nn.relu(_bn_apply(_conv1(h, main["c2"]), main["bn2"]))
    se = jnp.repeat(settings[:, :, None], N, axis=2)
    h = jnp.concatenate([h, se], axis=1)
    h = jax.nn.relu(_bn_apply(_conv1(h, main["c3"]), main["bn3"]))
    g = jnp.max(h, axis=2)
    return g, trans, None


# ---------------------------------------------------------------------------
# Demo
# ---------------------------------------------------------------------------

if __name__ == "__main__":
    key = jax.random.PRNGKey(0)
    kx, kset, kp = jax.random.split(key, 3)

    B, input_dim, settings_dim, hidden_dim, n_pts = 2, 6, 6, 64, 300
    x = jax.random.normal(kx, (B, input_dim, n_pts), jnp.float32)
    settings = jax.random.normal(kset, (B, settings_dim), jnp.float32)

    raw = init_raw_params(kp, input_dim, settings_dim, hidden_dim)
    params = fold_params(raw)

    gfeat, trans, trans_feat = pointnet_feat_forward(x, settings, params)
    gfeat, trans = jax.block_until_ready((gfeat, trans))

    g_ref, t_ref, _ = pointnet_feat_reference(x, settings, raw)

    assert gfeat.shape == (B, hidden_dim)
    assert trans.shape == (B, 3, 3)
    assert trans_feat is None

    # In-kernel dots run at explicit Precision.DEFAULT (bf16 MXU inputs, f32
    # accumulation), so compare against the exact-f32 reference with a
    # correspondingly loosened tolerance.
    t_err = float(jnp.max(jnp.abs(trans - t_ref)))
    g_err = float(jnp.max(jnp.abs(gfeat - g_ref)))
    assert jnp.allclose(trans, t_ref, atol=5e-2, rtol=5e-2), t_err
    assert jnp.allclose(gfeat, g_ref, atol=5e-2, rtol=5e-2), g_err

    print("KERNEL_OK")
</pallas_src>

<mosaic_0001>
module attributes {stable_mosaic.version = 11 : i64} {
  func.func @_stn_conv_max_kernel(%arg0: i32, %arg1: i32, %arg2: memref<1x6x384xf32, #tpu.memory_space<vmem>>, %arg3: memref<16x3xf32, #tpu.memory_space<vmem>>, %arg4: memref<16x1xf32, #tpu.memory_space<vmem>>, %arg5: memref<32x16xf32, #tpu.memory_space<vmem>>, %arg6: memref<32x1xf32, #tpu.memory_space<vmem>>, %arg7: memref<64x32xf32, #tpu.memory_space<vmem>>, %arg8: memref<64x1xf32, #tpu.memory_space<vmem>>, %arg9: memref<1x64x1xf32, #tpu.memory_space<vmem>>, %arg10: memref<64x128xf32, #tpu.memory_space<vmem>>) attributes {dimension_semantics = [#tpu.dimension_semantics<parallel>, #tpu.dimension_semantics<arbitrary>], iteration_bounds = array<i64: 2, 1>, scalar_prefetch = 0 : i64, scratch_operands = 1 : i64, tpu.core_type = #tpu.core_type<tc>, window_params = [{transform_indices = @transform_0, window_bounds = array<i64: 1, 6, 384>}, {pipeline_mode = #tpu.pipeline_mode<synchronous>, transform_indices = @transform_1, window_bounds = array<i64: 16, 3>}, {pipeline_mode = #tpu.pipeline_mode<synchronous>, transform_indices = @transform_2, window_bounds = array<i64: 16, 1>}, {pipeline_mode = #tpu.pipeline_mode<synchronous>, transform_indices = @transform_3, window_bounds = array<i64: 32, 16>}, {pipeline_mode = #tpu.pipeline_mode<synchronous>, transform_indices = @transform_4, window_bounds = array<i64: 32, 1>}, {pipeline_mode = #tpu.pipeline_mode<synchronous>, transform_indices = @transform_5, window_bounds = array<i64: 64, 32>}, {pipeline_mode = #tpu.pipeline_mode<synchronous>, transform_indices = @transform_6, window_bounds = array<i64: 64, 1>}, {transform_indices = @transform_7, window_bounds = array<i64: 1, 64, 1>}]} {
    %c0 = arith.constant 0 : index
    %c0_0 = arith.constant 0 : index
    %c0_1 = arith.constant 0 : index
    %0 = vector.load %arg2[%c0, %c0_0, %c0_1] : memref<1x6x384xf32, #tpu.memory_space<vmem>>, vector<1x3x384xf32>
    %1 = vector.shape_cast %0 : vector<1x3x384xf32> to vector<3x384xf32>
    %c0_2 = arith.constant 0 : index
    %c0_3 = arith.constant 0 : index
    %2 = vector.load %arg3[%c0_2, %c0_3] : memref<16x3xf32, #tpu.memory_space<vmem>>, vector<16x3xf32>
    %cst = arith.constant dense<0.000000e+00> : vector<16x384xf32>
    %3 = tpu.matmul %2, %1, %cst {dimension_numbers = #tpu.dot_dimension_numbers<[1], [0], [0], [1], [0, 0, 1, 1], [], []>} : vector<16x3xf32>, vector<3x384xf32>, vector<16x384xf32> -> vector<16x384xf32>
    %c0_4 = arith.constant 0 : index
    %c0_5 = arith.constant 0 : index
    %4 = vector.load %arg4[%c0_4, %c0_5] : memref<16x1xf32, #tpu.memory_space<vmem>>, vector<16x1xf32>
    %5 = vector.broadcast %4 : vector<16x1xf32> to vector<16x384xf32>
    %6 = arith.addf %3, %5 : vector<16x384xf32>
    %cst_6 = arith.constant 0.000000e+00 : f32
    %7 = vector.broadcast %cst_6 : f32 to vector<16x384xf32>
    %8 = arith.maximumf %6, %7 : vector<16x384xf32>
    %c0_7 = arith.constant 0 : index
    %c0_8 = arith.constant 0 : index
    %9 = vector.load %arg5[%c0_7, %c0_8] : memref<32x16xf32, #tpu.memory_space<vmem>>, vector<32x16xf32>
    %cst_9 = arith.constant dense<0.000000e+00> : vector<32x384xf32>
    %10 = tpu.matmul %9, %8, %cst_9 {dimension_numbers = #tpu.dot_dimension_numbers<[1], [0], [0], [1], [0, 0, 1, 1], [], []>} : vector<32x16xf32>, vector<16x384xf32>, vector<32x384xf32> -> vector<32x384xf32>
    %c0_10 = arith.constant 0 : index
    %c0_11 = arith.constant 0 : index
    %11 = vector.load %arg6[%c0_10, %c0_11] : memref<32x1xf32, #tpu.memory_space<vmem>>, vector<32x1xf32>
    %12 = vector.broadcast %11 : vector<32x1xf32> to vector<32x384xf32>
    %13 = arith.addf %10, %12 : vector<32x384xf32>
    %cst_12 = arith.constant 0.000000e+00 : f32
    %14 = vector.broadcast %cst_12 : f32 to vector<32x384xf32>
    %15 = arith.maximumf %13, %14 : vector<32x384xf32>
    %c0_13 = arith.constant 0 : index
    %c0_14 = arith.constant 0 : index
    %16 = vector.load %arg7[%c0_13, %c0_14] : memref<64x32xf32, #tpu.memory_space<vmem>>, vector<64x32xf32>
    %cst_15 = arith.constant dense<0.000000e+00> : vector<64x384xf32>
    %17 = tpu.matmul %16, %15, %cst_15 {dimension_numbers = #tpu.dot_dimension_numbers<[1], [0], [0], [1], [0, 0, 1, 1], [], []>} : vector<64x32xf32>, vector<32x384xf32>, vector<64x384xf32> -> vector<64x384xf32>
    %c0_16 = arith.constant 0 : index
    %c0_17 = arith.constant 0 : index
    %18 = vector.load %arg8[%c0_16, %c0_17] : memref<64x1xf32, #tpu.memory_space<vmem>>, vector<64x1xf32>
    %19 = vector.broadcast %18 : vector<64x1xf32> to vector<64x384xf32>
    %20 = arith.addf %17, %19 : vector<64x384xf32>
    %cst_18 = arith.constant 0.000000e+00 : f32
    %21 = vector.broadcast %cst_18 : f32 to vector<64x384xf32>
    %22 = arith.maximumf %20, %21 : vector<64x384xf32>
    %23 = tpu.iota {dimensions = array<i32: 1>} : vector<64x384xi32>
    %c384_i32 = arith.constant 384 : i32
    %24 = arith.muli %arg1, %c384_i32 : i32
    %25 = vector.broadcast %24 : i32 to vector<64x384xi32>
    %26 = arith.addi %25, %23 : vector<64x384xi32>
    %c300_i32 = arith.constant 300 : i32
    %27 = vector.broadcast %c300_i32 : i32 to vector<64x384xi32>
    %28 = arith.cmpi slt, %26, %27 : vector<64x384xi32>
    %cst_19 = arith.constant 0.000000e+00 : f32
    %29 = vector.broadcast %cst_19 : f32 to vector<64x384xf32>
    %30 = arith.select %28, %22, %29 : vector<64x384xi1>, vector<64x384xf32>
    %31 = vector.extract_strided_slice %30 {offsets = [0, 0], sizes = [64, 128], strides = [1, 1]} : vector<64x384xf32> to vector<64x128xf32>
    %32 = vector.extract_strided_slice %30 {offsets = [0, 128], sizes = [64, 128], strides = [1, 1]} : vector<64x384xf32> to vector<64x128xf32>
    %33 = arith.maximumf %31, %32 : vector<64x128xf32>
    %34 = vector.extract_strided_slice %30 {offsets = [0, 256], sizes = [64, 128], strides = [1, 1]} : vector<64x384xf32> to vector<64x128xf32>
    %35 = arith.maximumf %33, %34 : vector<64x128xf32>
    %c0_i32 = arith.constant 0 : i32
    %36 = arith.cmpi eq, %arg1, %c0_i32 : i32
    %37 = arith.extui %36 : i1 to i32
    %c0_i32_20 = arith.constant 0 : i32
    %38 = arith.cmpi ne, %37, %c0_i32_20 : i32
    scf.if %38 {
      %c0_25 = arith.constant 0 : index
      %c0_26 = arith.constant 0 : index
      %45 = vector.load %arg10[%c0_25, %c0_26] : memref<64x128xf32, #tpu.memory_space<vmem>>, vector<64x128xf32>
      tpu.vector_store %arg10[%c0_25, %c0_26], %35 {strides = array<i32>} : memref<64x128xf32, #tpu.memory_space<vmem>>, vector<64x128xf32>,
    } else {
    }
    %c0_i32_21 = arith.constant 0 : i32
    %39 = arith.cmpi ne, %arg1, %c0_i32_21 : i32
    %40 = arith.extui %39 : i1 to i32
    %c0_i32_22 = arith.constant 0 : i32
    %41 = arith.cmpi ne, %40, %c0_i32_22 : i32
    scf.if %41 {
      %c0_25 = arith.constant 0 : index
      %c0_26 = arith.constant 0 : index
      %45 = vector.load %arg10[%c0_25, %c0_26] : memref<64x128xf32, #tpu.memory_space<vmem>>, vector<64x128xf32>
      %46 = arith.maximumf %45, %35 : vector<64x128xf32>
      %c0_27 = arith.constant 0 : index
      %c0_28 = arith.constant 0 : index
      %47 = vector.load %arg10[%c0_27, %c0_28] : memref<64x128xf32, #tpu.memory_space<vmem>>, vector<64x128xf32>
      tpu.vector_store %arg10[%c0_27, %c0_28], %46 {strides = array<i32>} : memref<64x128xf32, #tpu.memory_space<vmem>>, vector<64x128xf32>,
    } else {
    }
    %c0_i32_23 = arith.constant 0 : i32
    %42 = arith.cmpi eq, %arg1, %c0_i32_23 : i32
    %43 = arith.extui %42 : i1 to i32
    %c0_i32_24 = arith.constant 0 : i32
    %44 = arith.cmpi ne, %43, %c0_i32_24 : i32
    scf.if %44 {
      %c0_25 = arith.constant 0 : index
      %c0_26 = arith.constant 0 : index
      %45 = vector.load %arg10[%c0_25, %c0_26] : memref<64x128xf32, #tpu.memory_space<vmem>>, vector<64x128xf32>
      %cst_27 = arith.constant dense<0xFF800000> : vector<64xf32>
      %46 = vector.multi_reduction <maximumf>, %45, %cst_27 [1] : vector<64x128xf32> to vector<64xf32>
      %47 = vector.shape_cast %46 : vector<64xf32> to vector<64x1xf32>
      %48 = vector.shape_cast %47 : vector<64x1xf32> to vector<1x64x1xf32>
      %c0_28 = arith.constant 0 : index
      %c0_29 = arith.constant 0 : index
      %c0_30 = arith.constant 0 : index
      %49 = vector.load %arg9[%c0_28, %c0_29, %c0_30] : memref<1x64x1xf32, #tpu.memory_space<vmem>>, vector<1x64x1xf32>
      tpu.vector_store %arg9[%c0_28, %c0_29, %c0_30], %48 {strides = array<i32>} : memref<1x64x1xf32, #tpu.memory_space<vmem>>, vector<1x64x1xf32>,
    } else {
    }
    return
  }
  func.func @transform_0(%arg0: i32, %arg1: i32) -> (i32, i32, i32) {
    %c0_i32 = arith.constant 0 : i32
    %c0_i32_0 = arith.constant 0 : i32
    return %arg0, %c0_i32, %arg1 : i32, i32, i32
  }
  func.func @transform_1(%arg0: i32, %arg1: i32) -> (i32, i32) {
    %c0_i32 = arith.constant 0 : i32
    %c0_i32_0 = arith.constant 0 : i32
    %c0_i32_1 = arith.constant 0 : i32
    return %c0_i32, %c0_i32_0 : i32, i32
  }
  func.func @transform_2(%arg0: i32, %arg1: i32) -> (i32, i32) {
    %c0_i32 = arith.constant 0 : i32
    %c0_i32_0 = arith.constant 0 : i32
    %c0_i32_1 = arith.constant 0 : i32
    return %c0_i32, %c0_i32_0 : i32, i32
  }
  func.func @transform_3(%arg0: i32, %arg1: i32) -> (i32, i32) {
    %c0_i32 = arith.constant 0 : i32
    %c0_i32_0 = arith.constant 0 : i32
    %c0_i32_1 = arith.constant 0 : i32
    return %c0_i32, %c0_i32_0 : i32, i32
  }
  func.func @transform_4(%arg0: i32, %arg1: i32) -> (i32, i32) {
    %c0_i32 = arith.constant 0 : i32
    %c0_i32_0 = arith.constant 0 : i32
    %c0_i32_1 = arith.constant 0 : i32
    return %c0_i32, %c0_i32_0 : i32, i32
  }
  func.func @transform_5(%arg0: i32, %arg1: i32) -> (i32, i32) {
    %c0_i32 = arith.constant 0 : i32
    %c0_i32_0 = arith.constant 0 : i32
    %c0_i32_1 = arith.constant 0 : i32
    return %c0_i32, %c0_i32_0 : i32, i32
  }
  func.func @transform_6(%arg0: i32, %arg1: i32) -> (i32, i32) {
    %c0_i32 = arith.constant 0 : i32
    %c0_i32_0 = arith.constant 0 : i32
    %c0_i32_1 = arith.constant 0 : i32
    return %c0_i32, %c0_i32_0 : i32, i32
  }
  func.func @transform_7(%arg0: i32, %arg1: i32) -> (i32, i32, i32) {
    %c0_i32 = arith.constant 0 : i32
    %c0_i32_0 = arith.constant 0 : i32
    %c0_i32_1 = arith.constant 0 : i32
    return %arg0, %c0_i32, %c0_i32_0 : i32, i32, i32
  }
}

module attributes {stable_mosaic.version = 11 : i64} {
  func.func @_main_conv_max_kernel(%arg0: i32, %arg1: i32, %arg2: memref<1x6x384xf32, #tpu.memory_space<vmem>>, %arg3: memref<1x16x3xf32, #tpu.memory_space<vmem>>, %arg4: memref<16x3xf32, #tpu.memory_space<vmem>>, %arg5: memref<16x1xf32, #tpu.memory_space<vmem>>, %arg6: memref<32x16xf32, #tpu.memory_space<vmem>>, %arg7: memref<32x1xf32, #tpu.memory_space<vmem>>, %arg8: memref<64x32xf32, #tpu.memory_space<vmem>>, %arg9: memref<1x64x1xf32, #tpu.memory_space<vmem>>, %arg10: memref<1x64x1xf32, #tpu.memory_space<vmem>>, %arg11: memref<64x128xf32, #tpu.memory_space<vmem>>) attributes {dimension_semantics = [#tpu.dimension_semantics<parallel>, #tpu.dimension_semantics<arbitrary>], iteration_bounds = array<i64: 2, 1>, scalar_prefetch = 0 : i64, scratch_operands = 1 : i64, tpu.core_type = #tpu.core_type<tc>, window_params = [{transform_indices = @transform_0, window_bounds = array<i64: 1, 6, 384>}, {transform_indices = @transform_1, window_bounds = array<i64: 1, 16, 3>}, {pipeline_mode = #tpu.pipeline_mode<synchronous>, transform_indices = @transform_2, window_bounds = array<i64: 16, 3>}, {pipeline_mode = #tpu.pipeline_mode<synchronous>, transform_indices = @transform_3, window_bounds = array<i64: 16, 1>}, {pipeline_mode = #tpu.pipeline_mode<synchronous>, transform_indices = @transform_4, window_bounds = array<i64: 32, 16>}, {pipeline_mode = #tpu.pipeline_mode<synchronous>, transform_indices = @transform_5, window_bounds = array<i64: 32, 1>}, {pipeline_mode = #tpu.pipeline_mode<synchronous>, transform_indices = @transform_6, window_bounds = array<i64: 64, 32>}, {transform_indices = @transform_7, window_bounds = array<i64: 1, 64, 1>}, {transform_indices = @transform_8, window_bounds = array<i64: 1, 64, 1>}]} {
    %c0 = arith.constant 0 : index
    %c0_0 = arith.constant 0 : index
    %c0_1 = arith.constant 0 : index
    %0 = vector.load %arg2[%c0, %c0_0, %c0_1] : memref<1x6x384xf32, #tpu.memory_space<vmem>>, vector<1x3x384xf32>
    %1 = vector.shape_cast %0 : vector<1x3x384xf32> to vector<3x384xf32>
    %c0_2 = arith.constant 0 : index
    %c3 = arith.constant 3 : index
    %c0_3 = arith.constant 0 : index
    %2 = vector.load %arg2[%c0_2, %c3, %c0_3] : memref<1x6x384xf32, #tpu.memory_space<vmem>>, vector<1x3x384xf32>
    %3 = vector.shape_cast %2 : vector<1x3x384xf32> to vector<3x384xf32>
    %c0_4 = arith.constant 0 : index
    %c0_5 = arith.constant 0 : index
    %c0_6 = arith.constant 0 : index
    %4 = vector.load %arg3[%c0_4, %c0_5, %c0_6] : memref<1x16x3xf32, #tpu.memory_space<vmem>>, vector<1x16x3xf32>
    %5 = vector.shape_cast %4 : vector<1x16x3xf32> to vector<16x3xf32>
    %cst = arith.constant dense<0.000000e+00> : vector<16x384xf32>
    %6 = tpu.matmul %5, %1, %cst {dimension_numbers = #tpu.dot_dimension_numbers<[1], [0], [0], [1], [0, 0, 1, 1], [], []>} : vector<16x3xf32>, vector<3x384xf32>, vector<16x384xf32> -> vector<16x384xf32>
    %c0_7 = arith.constant 0 : index
    %c0_8 = arith.constant 0 : index
    %7 = vector.load %arg4[%c0_7, %c0_8] : memref<16x3xf32, #tpu.memory_space<vmem>>, vector<16x3xf32>
    %cst_9 = arith.constant dense<0.000000e+00> : vector<16x384xf32>
    %8 = tpu.matmul %7, %3, %cst_9 {dimension_numbers = #tpu.dot_dimension_numbers<[1], [0], [0], [1], [0, 0, 1, 1], [], []>} : vector<16x3xf32>, vector<3x384xf32>, vector<16x384xf32> -> vector<16x384xf32>
    %9 = arith.addf %6, %8 : vector<16x384xf32>
    %c0_10 = arith.constant 0 : index
    %c0_11 = arith.constant 0 : index
    %10 = vector.load %arg5[%c0_10, %c0_11] : memref<16x1xf32, #tpu.memory_space<vmem>>, vector<16x1xf32>
    %11 = vector.broadcast %10 : vector<16x1xf32> to vector<16x384xf32>
    %12 = arith.addf %9, %11 : vector<16x384xf32>
    %cst_12 = arith.constant 0.000000e+00 : f32
    %13 = vector.broadcast %cst_12 : f32 to vector<16x384xf32>
    %14 = arith.maximumf %12, %13 : vector<16x384xf32>
    %c0_13 = arith.constant 0 : index
    %c0_14 = arith.constant 0 : index
    %15 = vector.load %arg6[%c0_13, %c0_14] : memref<32x16xf32, #tpu.memory_space<vmem>>, vector<32x16xf32>
    %cst_15 = arith.constant dense<0.000000e+00> : vector<32x384xf32>
    %16 = tpu.matmul %15, %14, %cst_15 {dimension_numbers = #tpu.dot_dimension_numbers<[1], [0], [0], [1], [0, 0, 1, 1], [], []>} : vector<32x16xf32>, vector<16x384xf32>, vector<32x384xf32> -> vector<32x384xf32>
    %c0_16 = arith.constant 0 : index
    %c0_17 = arith.constant 0 : index
    %17 = vector.load %arg7[%c0_16, %c0_17] : memref<32x1xf32, #tpu.memory_space<vmem>>, vector<32x1xf32>
    %18 = vector.broadcast %17 : vector<32x1xf32> to vector<32x384xf32>
    %19 = arith.addf %16, %18 : vector<32x384xf32>
    %cst_18 = arith.constant 0.000000e+00 : f32
    %20 = vector.broadcast %cst_18 : f32 to vector<32x384xf32>
    %21 = arith.maximumf %19, %20 : vector<32x384xf32>
    %c0_19 = arith.constant 0 : index
    %c0_20 = arith.constant 0 : index
    %22 = vector.load %arg8[%c0_19, %c0_20] : memref<64x32xf32, #tpu.memory_space<vmem>>, vector<64x32xf32>
    %cst_21 = arith.constant dense<0.000000e+00> : vector<64x384xf32>
    %23 = tpu.matmul %22, %21, %cst_21 {dimension_numbers = #tpu.dot_dimension_numbers<[1], [0], [0], [1], [0, 0, 1, 1], [], []>} : vector<64x32xf32>, vector<32x384xf32>, vector<64x384xf32> -> vector<64x384xf32>
    %c0_22 = arith.constant 0 : index
    %c0_23 = arith.constant 0 : index
    %c0_24 = arith.constant 0 : index
    %24 = vector.load %arg9[%c0_22, %c0_23, %c0_24] : memref<1x64x1xf32, #tpu.memory_space<vmem>>, vector<1x64x1xf32>
    %25 = vector.shape_cast %24 : vector<1x64x1xf32> to vector<64x1xf32>
    %26 = vector.broadcast %25 : vector<64x1xf32> to vector<64x384xf32>
    %27 = arith.addf %23, %26 : vector<64x384xf32>
    %cst_25 = arith.constant 0.000000e+00 : f32
    %28 = vector.broadcast %cst_25 : f32 to vector<64x384xf32>
    %29 = arith.maximumf %27, %28 : vector<64x384xf32>
    %30 = tpu.iota {dimensions = array<i32: 1>} : vector<64x384xi32>
    %c384_i32 = arith.constant 384 : i32
    %31 = arith.muli %arg1, %c384_i32 : i32
    %32 = vector.broadcast %31 : i32 to vector<64x384xi32>
    %33 = arith.addi %32, %30 : vector<64x384xi32>
    %c300_i32 = arith.constant 300 : i32
    %34 = vector.broadcast %c300_i32 : i32 to vector<64x384xi32>
    %35 = arith.cmpi slt, %33, %34 : vector<64x384xi32>
    %cst_26 = arith.constant 0.000000e+00 : f32
    %36 = vector.broadcast %cst_26 : f32 to vector<64x384xf32>
    %37 = arith.select %35, %29, %36 : vector<64x384xi1>, vector<64x384xf32>
    %38 = vector.extract_strided_slice %37 {offsets = [0, 0], sizes = [64, 128], strides = [1, 1]} : vector<64x384xf32> to vector<64x128xf32>
    %39 = vector.extract_strided_slice %37 {offsets = [0, 128], sizes = [64, 128], strides = [1, 1]} : vector<64x384xf32> to vector<64x128xf32>
    %40 = arith.maximumf %38, %39 : vector<64x128xf32>
    %41 = vector.extract_strided_slice %37 {offsets = [0, 256], sizes = [64, 128], strides = [1, 1]} : vector<64x384xf32> to vector<64x128xf32>
    %42 = arith.maximumf %40, %41 : vector<64x128xf32>
    %c0_i32 = arith.constant 0 : i32
    %43 = arith.cmpi eq, %arg1, %c0_i32 : i32
    %44 = arith.extui %43 : i1 to i32
    %c0_i32_27 = arith.constant 0 : i32
    %45 = arith.cmpi ne, %44, %c0_i32_27 : i32
    scf.if %45 {
      %c0_32 = arith.constant 0 : index
      %c0_33 = arith.constant 0 : index
      %52 = vector.load %arg11[%c0_32, %c0_33] : memref<64x128xf32, #tpu.memory_space<vmem>>, vector<64x128xf32>
      tpu.vector_store %arg11[%c0_32, %c0_33], %42 {strides = array<i32>} : memref<64x128xf32, #tpu.memory_space<vmem>>, vector<64x128xf32>,
    } else {
    }
    %c0_i32_28 = arith.constant 0 : i32
    %46 = arith.cmpi ne, %arg1, %c0_i32_28 : i32
    %47 = arith.extui %46 : i1 to i32
    %c0_i32_29 = arith.constant 0 : i32
    %48 = arith.cmpi ne, %47, %c0_i32_29 : i32
    scf.if %48 {
      %c0_32 = arith.constant 0 : index
      %c0_33 = arith.constant 0 : index
      %52 = vector.load %arg11[%c0_32, %c0_33] : memref<64x128xf32, #tpu.memory_space<vmem>>, vector<64x128xf32>
      %53 = arith.maximumf %52, %42 : vector<64x128xf32>
      %c0_34 = arith.constant 0 : index
      %c0_35 = arith.constant 0 : index
      %54 = vector.load %arg11[%c0_34, %c0_35] : memref<64x128xf32, #tpu.memory_space<vmem>>, vector<64x128xf32>
      tpu.vector_store %arg11[%c0_34, %c0_35], %53 {strides = array<i32>} : memref<64x128xf32, #tpu.memory_space<vmem>>, vector<64x128xf32>,
    } else {
    }
    %c0_i32_30 = arith.constant 0 : i32
    %49 = arith.cmpi eq, %arg1, %c0_i32_30 : i32
    %50 = arith.extui %49 : i1 to i32
    %c0_i32_31 = arith.constant 0 : i32
    %51 = arith.cmpi ne, %50, %c0_i32_31 : i32
    scf.if %51 {
      %c0_32 = arith.constant 0 : index
      %c0_33 = arith.constant 0 : index
      %52 = vector.load %arg11[%c0_32, %c0_33] : memref<64x128xf32, #tpu.memory_space<vmem>>, vector<64x128xf32>
      %cst_34 = arith.constant dense<0xFF800000> : vector<64xf32>
      %53 = vector.multi_reduction <maximumf>, %52, %cst_34 [1] : vector<64x128xf32> to vector<64xf32>
      %54 = vector.shape_cast %53 : vector<64xf32> to vector<64x1xf32>
      %55 = vector.shape_cast %54 : vector<64x1xf32> to vector<1x64x1xf32>
      %c0_35 = arith.constant 0 : index
      %c0_36 = arith.constant 0 : index
      %c0_37 = arith.constant 0 : index
      %56 = vector.load %arg10[%c0_35, %c0_36, %c0_37] : memref<1x64x1xf32, #tpu.memory_space<vmem>>, vector<1x64x1xf32>
      tpu.vector_store %arg10[%c0_35, %c0_36, %c0_37], %55 {strides = array<i32>} : memref<1x64x1xf32, #tpu.memory_space<vmem>>, vector<1x64x1xf32>,
    } else {
    }
    return
  }
  func.func @transform_0(%arg0: i32, %arg1: i32) -> (i32, i32, i32) {
    %c0_i32 = arith.constant 0 : i32
    %c0_i32_0 = arith.constant 0 : i32
    return %arg0, %c0_i32, %arg1 : i32, i32, i32
  }
  func.func @transform_1(%arg0: i32, %arg1: i32) -> (i32, i32, i32) {
    %c0_i32 = arith.constant 0 : i32
    %c0_i32_0 = arith.constant 0 : i32
    %c0_i32_1 = arith.constant 0 : i32
    return %arg0, %c0_i32, %c0_i32_0 : i32, i32, i32
  }
  func.func @transform_2(%arg0: i32, %arg1: i32) -> (i32, i32) {
    %c0_i32 = arith.constant 0 : i32
    %c0_i32_0 = arith.constant 0 : i32
    %c0_i32_1 = arith.constant 0 : i32
    return %c0_i32, %c0_i32_0 : i32, i32
  }
  func.func @transform_3(%arg0: i32, %arg1: i32) -> (i32, i32) {
    %c0_i32 = arith.constant 0 : i32
    %c0_i32_0 = arith.constant 0 : i32
    %c0_i32_1 = arith.constant 0 : i32
    return %c0_i32, %c0_i32_0 : i32, i32
  }
  func.func @transform_4(%arg0: i32, %arg1: i32) -> (i32, i32) {
    %c0_i32 = arith.constant 0 : i32
    %c0_i32_0 = arith.constant 0 : i32
    %c0_i32_1 = arith.constant 0 : i32
    return %c0_i32, %c0_i32_0 : i32, i32
  }
  func.func @transform_5(%arg0: i32, %arg1: i32) -> (i32, i32) {
    %c0_i32 = arith.constant 0 : i32
    %c0_i32_0 = arith.constant 0 : i32
    %c0_i32_1 = arith.constant 0 : i32
    return %c0_i32, %c0_i32_0 : i32, i32
  }
  func.func @transform_6(%arg0: i32, %arg1: i32) -> (i32, i32) {
    %c0_i32 = arith.constant 0 : i32
    %c0_i32_0 = arith.constant 0 : i32
    %c0_i32_1 = arith.constant 0 : i32
    return %c0_i32, %c0_i32_0 : i32, i32
  }
  func.func @transform_7(%arg0: i32, %arg1: i32) -> (i32, i32, i32) {
    %c0_i32 = arith.constant 0 : i32
    %c0_i32_0 = arith.constant 0 : i32
    %c0_i32_1 = arith.constant 0 : i32
    return %arg0, %c0_i32, %c0_i32_0 : i32, i32, i32
  }
  func.func @transform_8(%arg0: i32, %arg1: i32) -> (i32, i32, i32) {
    %c0_i32 = arith.constant 0 : i32
    %c0_i32_0 = arith.constant 0 : i32
    %c0_i32_1 = arith.constant 0 : i32
    return %arg0, %c0_i32, %c0_i32_0 : i32, i32, i32
  }
}

</mosaic_0001>

<llo_original>
// kernel: pointnet_feat_forward.2
$region0: #{pointnet_feat_forward.2}
  #allocation0 [shape = 'u32[]', space=smem, size = 0x4, offset = 0x4, fixed_abs, tag = 'smem constant byte address 0x4 - core index']
  #allocation1 [shape = 'u32[144,128]{1,0:T(1,128)}', space=vmem, size = 0x12000, scoped, tag = 'internal scratch']
  #allocation2 [shape = 'f32[64,128]{1,0:T(8,128)}', space=vmem, size = 0x8000, scoped, tag = 'scratch operand']
  %s0 = inlined_call_operand.vmem [shape: f32[2,6,300], index: 0, kind: input, shape index: {}]
  %s1 = inlined_call_operand.vmem [shape: f32[16,3], index: 1, kind: input, shape index: {}]
  %s2 = inlined_call_operand.vmem [shape: f32[16,1], index: 2, kind: input, shape index: {}]
  %s3 = inlined_call_operand.vmem [shape: f32[32,16], index: 3, kind: input, shape index: {}]
  %s4 = inlined_call_operand.vmem [shape: f32[32,1], index: 4, kind: input, shape index: {}]
  %s5 = inlined_call_operand.vmem [shape: f32[64,32], index: 5, kind: input, shape index: {}]
  %s6 = inlined_call_operand.vmem [shape: f32[64,1], index: 6, kind: input, shape index: {}]
  %s7 = inlined_call_operand.vmem [shape: f32[2,64,1], index: 7, kind: output, shape index: {}]
  %s8 = sld [smem:[#allocation0]]
  $region73: #{pointnet_feat_forward.2} parent=0
    _
  %s10 = ssub.s32 1, %s8
  %s11 = scalar_select 0, %s10, %s8
  loop: start=0, step=1, limit=4
  $region2: #{pointnet_feat_forward.2} parent=0 // loop_pre_header
    _
  $region3: #{pointnet_feat_forward.2} parent=0 // loop_header
    %s13 = sphi 0, %s17
    %p14 = scmp.ge.s32.totalorder %s13, 4
    %s20 = sphi 0, %s32
    %s21 = sphi 0, %s28
    %s22 = sphi 0, %s20
    %s23 = sphi 0, %s21
    %s24 = sphi 0, %s22
    %s25 = sphi 0, %s23
    %s37 = sphi 0, %s39
    %s40 = sphi 0, %s37
    %s41 = sphi 0, %s40
    %s57 = sphi 0, %s41
    %s61 = sphi 0, %s61
    %s63 = sphi 0, %s61
    %s64 = sphi 0, %s63
    %s78 = sphi 0, %s64
    %s82 = sphi 0, %s82
    %s84 = sphi 0, %s82
    %s85 = sphi 0, %s84
    %s99 = sphi 0, %s85
    %s103 = sphi 0, %s103
    %s105 = sphi 0, %s103
    %s106 = sphi 0, %s105
    %s120 = sphi 0, %s106
    %s124 = sphi 0, %s124
    %s126 = sphi 0, %s124
    %s127 = sphi 0, %s126
    %s141 = sphi 0, %s127
    %s145 = sphi 0, %s145
    %s147 = sphi 0, %s145
    %s148 = sphi 0, %s147
    %s162 = sphi 0, %s148
    %s166 = sphi 0, %s166
    %s168 = sphi 0, %s166
    %s169 = sphi 0, %s168
    %s183 = sphi 0, %s169
    %s189 = sphi 0, %s191
    %s192 = sphi 0, %s189
    %s193 = sphi 0, %s192
    %s209 = sphi 0, %s193
  $region4: #{pointnet_feat_forward.2} parent=0 // loop_header_branch
    %16 = sbr.rel (%p14) target = $region8
  $region5: #{pointnet_feat_forward.2} parent=0 // loop_body
    %s18 = ssub.s32 %s13, 1
    %s19 = ssub.s32 %s13, 2
    %s26 = sadd.s32 1, %s21
    %p27 = scmp.ge.s32.totalorder %s26, 1
    %s28 = scalar_select %p27, 0, %s26
    %s29 = sadd.s32 1, %s20
    %s30 = scalar_select %p27, %s29, %s20
    %p31 = scmp.ge.s32.totalorder %s30, 2
    %s32 = scalar_select %p31, 0, %s30
    %s33 = ssub.s32 %s20, %s32
    %s34 = ssub.s32 %s21, %s28
    %s35 = sor.u32 %s33, %s34
    %p36 = scmp.eq.s32.totalorder %s35, 0
    %s38 = sadd.s32 %s37, 1
    %s39 = scalar_select %p36, %s37, %s38
    %p42 = pneg %p36
    %p43 = scmp.eq.s32.totalorder %s13, 1
    %p44 = por %p42, %p43
    %p45 = scmp.ne.s32.totalorder %s37, %s40
    %p46 = scmp.eq.s32.totalorder %s13, 0
    %p47 = por %p45, %p46
    %p48 = scmp.ne.s32.totalorder %s37, %s40
    %p49 = scmp.eq.s32.totalorder %s18, 1
    %p50 = por %p48, %p49
    %p51 = scmp.ne.s32.totalorder %s40, %s41
    %p52 = scmp.eq.s32.totalorder %s18, 0
    %p53 = por %p51, %p52
    %p54 = scmp.ne.s32.totalorder %s40, %s41
    %p55 = scmp.eq.s32.totalorder %s19, 1
    %p56 = por %p54, %p55
    %p58 = scmp.ne.s32.totalorder %s41, %s57
    %p59 = scmp.eq.s32.totalorder %s19, 0
    %p60 = por %p58, %p59
    %s62 = sadd.s32 %s61, 1
    %p65 = scmp.eq.s32.totalorder %s13, 1
    %p66 = scmp.ne.s32.totalorder %s61, %s63
    %p67 = scmp.eq.s32.totalorder %s13, 0
    %p68 = por %p66, %p67
    %p69 = scmp.ne.s32.totalorder %s61, %s63
    %p70 = scmp.eq.s32.totalorder %s18, 1
    %p71 = por %p69, %p70
    %p72 = scmp.ne.s32.totalorder %s63, %s64
    %p73 = scmp.eq.s32.totalorder %s18, 0
    %p74 = por %p72, %p73
    %p75 = scmp.ne.s32.totalorder %s63, %s64
    %p76 = scmp.eq.s32.totalorder %s19, 1
    %p77 = por %p75, %p76
    %p79 = scmp.ne.s32.totalorder %s64, %s78
    %p80 = scmp.eq.s32.totalorder %s19, 0
    %p81 = por %p79, %p80
    %s83 = sadd.s32 %s82, 1
    %p86 = scmp.eq.s32.totalorder %s13, 1
    %p87 = scmp.ne.s32.totalorder %s82, %s84
    %p88 = scmp.eq.s32.totalorder %s13, 0
    %p89 = por %p87, %p88
    %p90 = scmp.ne.s32.totalorder %s82, %s84
    %p91 = scmp.eq.s32.totalorder %s18, 1
    %p92 = por %p90, %p91
    %p93 = scmp.ne.s32.totalorder %s84, %s85
    %p94 = scmp.eq.s32.totalorder %s18, 0
    %p95 = por %p93, %p94
    %p96 = scmp.ne.s32.totalorder %s84, %s85
    %p97 = scmp.eq.s32.totalorder %s19, 1
    %p98 = por %p96, %p97
    %p100 = scmp.ne.s32.totalorder %s85, %s99
    %p101 = scmp.eq.s32.totalorder %s19, 0
    %p102 = por %p100, %p101
    %s104 = sadd.s32 %s103, 1
    %p107 = scmp.eq.s32.totalorder %s13, 1
    %p108 = scmp.ne.s32.totalorder %s103, %s105
    %p109 = scmp.eq.s32.totalorder %s13, 0
    %p110 = por %p108, %p109
    %p111 = scmp.ne.s32.totalorder %s103, %s105
    %p112 = scmp.eq.s32.totalorder %s18, 1
    %p113 = por %p111, %p112
    %p114 = scmp.ne.s32.totalorder %s105, %s106
    %p115 = scmp.eq.s32.totalorder %s18, 0
    %p116 = por %p114, %p115
    %p117 = scmp.ne.s32.totalorder %s105, %s106
    %p118 = scmp.eq.s32.totalorder %s19, 1
    %p119 = por %p117, %p118
    %p121 = scmp.ne.s32.totalorder %s106, %s120
    %p122 = scmp.eq.s32.totalorder %s19, 0
    %p123 = por %p121, %p122
    %s125 = sadd.s32 %s124, 1
    %p128 = scmp.eq.s32.totalorder %s13, 1
    %p129 = scmp.ne.s32.totalorder %s124, %s126
    %p130 = scmp.eq.s32.totalorder %s13, 0
    %p131 = por %p129, %p130
    %p132 = scmp.ne.s32.totalorder %s124, %s126
    %p133 = scmp.eq.s32.totalorder %s18, 1
    %p134 = por %p132, %p133
    %p135 = scmp.ne.s32.totalorder %s126, %s127
    %p136 = scmp.eq.s32.totalorder %s18, 0
    %p137 = por %p135, %p136
    %p138 = scmp.ne.s32.totalorder %s126, %s127
    %p139 = scmp.eq.s32.totalorder %s19, 1
    %p140 = por %p138, %p139
    %p142 = scmp.ne.s32.totalorder %s127, %s141
    %p143 = scmp.eq.s32.totalorder %s19, 0
    %p144 = por %p142, %p143
    %s146 = sadd.s32 %s145, 1
    %p149 = scmp.eq.s32.totalorder %s13, 1
    %p150 = scmp.ne.s32.totalorder %s145, %s147
    %p151 = scmp.eq.s32.totalorder %s13, 0
    %p152 = por %p150, %p151
    %p153 = scmp.ne.s32.totalorder %s145, %s147
    %p154 = scmp.eq.s32.totalorder %s18, 1
    %p155 = por %p153, %p154
    %p156 = scmp.ne.s32.totalorder %s147, %s148
    %p157 = scmp.eq.s32.totalorder %s18, 0
    %p158 = por %p156, %p157
    %p159 = scmp.ne.s32.totalorder %s147, %s148
    %p160 = scmp.eq.s32.totalorder %s19, 1
    %p161 = por %p159, %p160
    %p163 = scmp.ne.s32.totalorder %s148, %s162
    %p164 = scmp.eq.s32.totalorder %s19, 0
    %p165 = por %p163, %p164
    %s167 = sadd.s32 %s166, 1
    %p170 = scmp.eq.s32.totalorder %s13, 1
    %p171 = scmp.ne.s32.totalorder %s166, %s168
    %p172 = scmp.eq.s32.totalorder %s13, 0
    %p173 = por %p171, %p172
    %p174 = scmp.ne.s32.totalorder %s166, %s168
    %p175 = scmp.eq.s32.totalorder %s18, 1
    %p176 = por %p174, %p175
    %p177 = scmp.ne.s32.totalorder %s168, %s169
    %p178 = scmp.eq.s32.totalorder %s18, 0
    %p179 = por %p177, %p178
    %p180 = scmp.ne.s32.totalorder %s168, %s169
    %p181 = scmp.eq.s32.totalorder %s19, 1
    %p182 = por %p180, %p181
    %p184 = scmp.ne.s32.totalorder %s169, %s183
    %p185 = scmp.eq.s32.totalorder %s19, 0
    %p186 = por %p184, %p185
    %s187 = ssub.s32 %s20, %s32
    %p188 = scmp.eq.s32.totalorder %s187, 0
    %s190 = sadd.s32 %s189, 1
    %s191 = scalar_select %p188, %s189, %s190
    %p194 = pneg %p188
    %p195 = scmp.eq.s32.totalorder %s13, 1
    %p196 = por %p194, %p195
    %p197 = scmp.ne.s32.totalorder %s189, %s192
    %p198 = scmp.eq.s32.totalorder %s13, 0
    %p199 = por %p197, %p198
    %p200 = scmp.ne.s32.totalorder %s189, %s192
    %p201 = scmp.eq.s32.totalorder %s18, 1
    %p202 = por %p200, %p201
    %p203 = scmp.ne.s32.totalorder %s192, %s193
    %p204 = scmp.eq.s32.totalorder %s18, 0
    %p205 = por %p203, %p204
    %p206 = scmp.ne.s32.totalorder %s192, %s193
    %p207 = scmp.eq.s32.totalorder %s19, 1
    %p208 = por %p206, %p207
    %p210 = scmp.ne.s32.totalorder %s193, %s209
    %p211 = scmp.eq.s32.totalorder %s19, 0
    %p212 = por %p210, %p211
    %p213 = scmp.le.s32.totalorder 1, %s13
    %p214 = scmp.lt.s32.totalorder %s13, 3
    %p215 = pnand %p213, %p214
    %p216 = pneg %p215
    // Predicated region
    $region9: #{pointnet_feat_forward.2} parent=5 // pred_check
      _
    $region10: #{pointnet_feat_forward.2} parent=5 // pred_check_branch
      %218 = sbr.rel (%p215) target = $region12
    $region11: #{pointnet_feat_forward.2} parent=5 // pred_region
      %s219 = ssub.s32 %s13, 1
      // Predicated region
      $region13: #{pointnet_feat_forward.2} parent=11 // pred_check
        %p220 = pneg %p74
      $region14: #{pointnet_feat_forward.2} parent=11 // pred_check_branch
        %222 = sbr.rel (%p220) target = $region16
      $region15: #{pointnet_feat_forward.2} parent=11 // pred_region
        _
      $region16: #{pointnet_feat_forward.2} parent=11 // pred_fallthru
        _
      // Predicated region
      $region17: #{pointnet_feat_forward.2} parent=11 // pred_check
        %p223 = pneg %p95
      $region18: #{pointnet_feat_forward.2} parent=11 // pred_check_branch
        %225 = sbr.rel (%p223) target = $region20
      $region19: #{pointnet_feat_forward.2} parent=11 // pred_region
        _
      $region20: #{pointnet_feat_forward.2} parent=11 // pred_fallthru
        _
      // Predicated region
      $region21: #{pointnet_feat_forward.2} parent=11 // pred_check
        %p226 = pneg %p116
      $region22: #{pointnet_feat_forward.2} parent=11 // pred_check_branch
        %228 = sbr.rel (%p226) target = $region24
      $region23: #{pointnet_feat_forward.2} parent=11 // pred_region
        _
      $region24: #{pointnet_feat_forward.2} parent=11 // pred_fallthru
        _
      // Predicated region
      $region25: #{pointnet_feat_forward.2} parent=11 // pred_check
        %p229 = pneg %p137
      $region26: #{pointnet_feat_forward.2} parent=11 // pred_check_branch
        %231 = sbr.rel (%p229) target = $region28
      $region27: #{pointnet_feat_forward.2} parent=11 // pred_region
        _
      $region28: #{pointnet_feat_forward.2} parent=11 // pred_fallthru
        _
      // Predicated region
      $region29: #{pointnet_feat_forward.2} parent=11 // pred_check
        %p232 = pneg %p158
      $region30: #{pointnet_feat_forward.2} parent=11 // pred_check_branch
        %234 = sbr.rel (%p232) target = $region32
      $region31: #{pointnet_feat_forward.2} parent=11 // pred_region
        _
      $region32: #{pointnet_feat_forward.2} parent=11 // pred_fallthru
        _
      // Predicated region
      $region33: #{pointnet_feat_forward.2} parent=11 // pred_check
        %p235 = pneg %p179
      $region34: #{pointnet_feat_forward.2} parent=11 // pred_check_branch
        %237 = sbr.rel (%p235) target = $region36
      $region35: #{pointnet_feat_forward.2} parent=11 // pred_region
        _
      $region36: #{pointnet_feat_forward.2} parent=11 // pred_fallthru
        _
    $region12: #{pointnet_feat_forward.2} parent=5 // pred_fallthru
      _
    %p238 = scmp.lt.s32.totalorder %s13, 2
    // Predicated region
    $region37: #{pointnet_feat_forward.2} parent=5 // pred_check
      %p239 = pneg %p238
    $region38: #{pointnet_feat_forward.2} parent=5 // pred_check_branch
      %241 = sbr.rel (%p239) target = $region40
    $region39: #{pointnet_feat_forward.2} parent=5 // pred_region
      // Predicated region
      $region41: #{pointnet_feat_forward.2} parent=39 // pred_check
        %p242 = pneg %p47
      $region42: #{pointnet_feat_forward.2} parent=39 // pred_check_branch
        %244 = sbr.rel (%p242) target = $region44
      $region43: #{pointnet_feat_forward.2} parent=39 // pred_region
        %s245 = smul.u32 3, %s21
        %p246 = scmp.lt.s32.totalorder %s20, 1
        %s247 = scalar_select %p246, %s20, 1
        %p248 = scmp.lt.s32.totalorder %s245, 2
        %s249 = scalar_select %p248, %s245, 2
        %s250 = smul.addr %s247, 3
        %s251 = sadd.s32 %s249, %s250
        %s252 = smul.addr %s251, 8
        %s253 = scalar_lea.vmem %s0, %s252
        %s254 = smul.u32 3, %s21
      $region44: #{pointnet_feat_forward.2} parent=39 // pred_fallthru
        _
    $region40: #{pointnet_feat_forward.2} parent=5 // pred_fallthru
      _
    %p255 = scmp.le.s32.totalorder 1, %s13
    %p256 = scmp.lt.s32.totalorder %s13, 3
    %p257 = pnand %p255, %p256
    %p258 = pneg %p257
    // Predicated region
    $region45: #{pointnet_feat_forward.2} parent=5 // pred_check
      _
    $region46: #{pointnet_feat_forward.2} parent=5 // pred_check_branch
      %260 = sbr.rel (%p257) target = $region48
    $region47: #{pointnet_feat_forward.2} parent=5 // pred_region
      %s261 = ssub.s32 %s13, 1
      %s262 = smul.u32 3, %s23
      %p263 = scmp.lt.s32.totalorder %s22, 1
      %s264 = scalar_select %p263, %s22, 1
      %p265 = scmp.lt.s32.totalorder %s262, 2
      %s266 = scalar_select %p265, %s262, 2
      %s267 = smul.addr %s264, 3
      %s268 = sadd.s32 %s266, %s267
      %s269 = smul.addr %s268, 8
      %s270 = scalar_lea.vmem %s0, %s269
      %p271 = pneg %p53
      %p272 = pneg %p50
      %p273 = pneg %p74
      %p274 = pneg %p71
      %p275 = pneg %p95
      %p276 = pneg %p92
      %p277 = pneg %p116
      %p278 = pneg %p113
      %p279 = pneg %p137
      %p280 = pneg %p134
      %p281 = pneg %p158
      %p282 = pneg %p155
      %p283 = pneg %p179
      %p284 = pneg %p176
      %p285 = pneg %p205
      %p286 = pneg %p202
      %p287 = scmp.lt.s32.totalorder %s22, 1
      %s288 = scalar_select %p287, %s22, 1
      %s289 = smul.addr %s288, 8
      %s290 = smul.addr %s289, 8
      %s291 = scalar_lea.vmem %s7, %s290
      %s292 = smul.u32 3, %s23
      %p293 = scmp.lt.s32.totalorder %s22, 1
      %s294 = scalar_select %p293, %s22, 1
      %p295 = scmp.lt.s32.totalorder %s292, 2
      %s296 = scalar_select %p295, %s292, 2
      %s297 = smul.addr %s294, 3
      %s298 = sadd.s32 %s296, %s297
      %s299 = smul.addr %s298, 8
      %s300 = scalar_lea.vmem %s0, %s299
      %s301 = smul.u32 3, %s23
      %p302 = scmp.lt.s32.totalorder %s22, 1
      %s303 = scalar_select %p302, %s22, 1
      %s304 = smul.addr %s303, 8
      %s305 = smul.addr %s304, 8
      %s306 = scalar_lea.vmem %s7, %s305
      %v307 = vld [vmem:[%s300] sm:$0x7]
      %v308 = vld [vmem:[%s300 + $0x8] sm:$0x7]
      %v309 = vld [vmem:[%s300 + $0x10] sm:$0x7]
      %v310 = vld [vmem:[%s1] sm:$0xff]
      %v311 = vld [vmem:[%s1 + $0x8] sm:$0xff]
      %v312 = vld [vmem:[%s2] sm:$0xff]
      %v313 = vld [vmem:[%s2 + $0x8] sm:$0xff]
      %315 = vset.pattern.permute.xlu0 0
      %316 = vperm.xlu0 %315, %v312
      %v317 = vpop.permute.xlu0 %316
      %320 = vset.pattern.permute.xlu0 0
      %321 = vperm.xlu0 %320, %v313
      %v322 = vpop.permute.xlu0 %321
      %vm324 = vcmask 23552
      %v326 = vsel %vm324, %v310, 0
      %v329 = vsel %vm324, %v311, 0
      %vm331 = vcmask 1042432
      %v333 = vsel %vm331, %v307, 0
      %v336 = vsel %vm331, %v308, 0
      %v339 = vsel %vm331, %v309, 0
      %341 = vmatprep.subr.mxu0 %v336
      %342 = vmatpush1.msra.mxu0 %v333
      %343 = vmatprep.subr.mxu0 0.0
      %344 = vmatpush1.msra.mxu0 0.0
      %345 = vmatprep.subr.mxu0 0.0
      %346 = vmatpush1.msra.mxu0 0.0
      %347 = vmatprep.subr.mxu0 0.0
      %348 = vmatpush1.msra.mxu0 0.0
      %349 = vmatprep.subr.mxu0 0.0
      %350 = vmatpush1.msra.mxu0 0.0
      %351 = vmatprep.subr.mxu0 0.0
      %352 = vmatpush1.msra.mxu0 0.0
      %353 = vmatprep.subr.mxu0 0.0
      %354 = vmatpush1.msra.mxu0 0.0
      %355 = vmatprep.subr.mxu0 0.0
      %356 = vmatpush1.msra.mxu0 0.0
      %357 = vmatprep.subr.mxu0 0.0
      %358 = vmatpush1.msra.mxu0 0.0
      %359 = vmatprep.subr.mxu0 0.0
      %360 = vmatpush1.msra.mxu0 0.0
      %361 = vmatprep.subr.mxu0 0.0
      %362 = vmatpush1.msra.mxu0 0.0
      %363 = vmatprep.subr.mxu0 0.0
      %364 = vmatpush1.msra.mxu0 0.0
      %365 = vmatprep.subr.mxu0 0.0
      %366 = vmatpush1.msra.mxu0 0.0
      %367 = vmatprep.subr.mxu0 0.0
      %368 = vmatpush1.msra.mxu0 0.0
      %369 = vmatprep.subr.mxu0 0.0
      %370 = vmatpush1.msra.mxu0 0.0
      %371 = vmatprep.subr.mxu0 0.0
      %372 = vmatpush1.msra.mxu0 0.0
      %373 = vmatprep.subr.mxu0 0.0
      %374 = vmatpush1.msra.mxu0 0.0
      %375 = vmatprep.subr.mxu0 0.0
      %376 = vmatpush1.msra.mxu0 0.0
      %377 = vmatprep.subr.mxu0 0.0
      %378 = vmatpush1.msra.mxu0 0.0
      %379 = vmatprep.subr.mxu0 0.0
      %380 = vmatpush1.msra.mxu0 0.0
      %381 = vmatprep.subr.mxu0 0.0
      %382 = vmatpush1.msra.mxu0 0.0
      %383 = vmatprep.subr.mxu0 0.0
      %384 = vmatpush1.msra.mxu0 0.0
      %385 = vmatprep.subr.mxu0 0.0
      %386 = vmatpush1.msra.mxu0 0.0
      %387 = vmatprep.subr.mxu0 0.0
      %388 = vmatpush1.msra.mxu0 0.0
      %389 = vmatprep.subr.mxu0 0.0
      %390 = vmatpush1.msra.mxu0 0.0
      %391 = vmatprep.subr.mxu0 0.0
      %392 = vmatpush1.msra.mxu0 0.0
      %393 = vmatprep.subr.mxu0 0.0
      %394 = vmatpush1.msra.mxu0 0.0
      %395 = vmatprep.subr.mxu0 0.0
      %396 = vmatpush1.msra.mxu0 0.0
      %397 = vmatprep.subr.mxu0 0.0
      %398 = vmatpush1.msra.mxu0 0.0
      %399 = vmatprep.subr.mxu0 0.0
      %400 = vmatpush1.msra.mxu0 0.0
      %401 = vmatprep.subr.mxu0 0.0
      %402 = vmatpush1.msra.mxu0 0.0
      %403 = vmatprep.subr.mxu0 0.0
      %404 = vmatpush1.msra.mxu0 0.0
      %405 = vmatprep.mubr.f32.mxu0 0.0
      %406 = vmatmul.mubr.f32.gmra.mrb[0].mxu0 %v326
      %v407 = vpop.f32.mrb[0].mxu0
      %v408 = vadd.f32 %v317, %v407
      %v409 = vpop.f32.mrb[0].mxu0
      %v410 = vadd.f32 %v317, %v409
      %411 = vmatprep.mubr.f32.mxu0 0.0
      %412 = vmatmul.mubr.f32.gmra.mrb[0].mxu0 %v329
      %v413 = vpop.f32.mrb[0].mxu0
      %v414 = vadd.f32 %v322, %v413
      %v415 = vpop.f32.mrb[0].mxu0
      %v416 = vadd.f32 %v322, %v415
      %417 = vdwg.mxu0
      %418 = vmatprep.subr.mxu0 0.0
      %419 = vmatpush1.msra.mxu0 %v339
      %420 = vmatprep.subr.mxu0 0.0
      %421 = vmatpush1.msra.mxu0 0.0
      %422 = vmatprep.subr.mxu0 0.0
      %423 = vmatpush1.msra.mxu0 0.0
      %424 = vmatprep.subr.mxu0 0.0
      %425 = vmatpush1.msra.mxu0 0.0
      %426 = vmatprep.subr.mxu0 0.0
      %427 = vmatpush1.msra.mxu0 0.0
      %428 = vmatprep.subr.mxu0 0.0
      %429 = vmatpush1.msra.mxu0 0.0
      %430 = vmatprep.subr.mxu0 0.0
      %431 = vmatpush1.msra.mxu0 0.0
      %432 = vmatprep.subr.mxu0 0.0
      %433 = vmatpush1.msra.mxu0 0.0
      %434 = vmatprep.subr.mxu0 0.0
      %435 = vmatpush1.msra.mxu0 0.0
      %436 = vmatprep.subr.mxu0 0.0
      %437 = vmatpush1.msra.mxu0 0.0
      %438 = vmatprep.subr.mxu0 0.0
      %439 = vmatpush1.msra.mxu0 0.0
      %440 = vmatprep.subr.mxu0 0.0
      %441 = vmatpush1.msra.mxu0 0.0
      %442 = vmatprep.subr.mxu0 0.0
      %443 = vmatpush1.msra.mxu0 0.0
      %444 = vmatprep.subr.mxu0 0.0
      %445 = vmatpush1.msra.mxu0 0.0
      %446 = vmatprep.subr.mxu0 0.0
      %447 = vmatpush1.msra.mxu0 0.0
      %448 = vmatprep.subr.mxu0 0.0
      %449 = vmatpush1.msra.mxu0 0.0
      %450 = vmatprep.subr.mxu0 0.0
      %451 = vmatpush1.msra.mxu0 0.0
      %452 = vmatprep.subr.mxu0 0.0
      %453 = vmatpush1.msra.mxu0 0.0
      %454 = vmatprep.subr.mxu0 0.0
      %455 = vmatpush1.msra.mxu0 0.0
      %456 = vmatprep.subr.mxu0 0.0
      %457 = vmatpush1.msra.mxu0 0.0
      %458 = vmatprep.subr.mxu0 0.0
      %459 = vmatpush1.msra.mxu0 0.0
      %460 = vmatprep.subr.mxu0 0.0
      %461 = vmatpush1.msra.mxu0 0.0
      %462 = vmatprep.subr.mxu0 0.0
      %463 = vmatpush1.msra.mxu0 0.0
      %464 = vmatprep.subr.mxu0 0.0
      %465 = vmatpush1.msra.mxu0 0.0
      %466 = vmatprep.subr.mxu0 0.0
      %467 = vmatpush1.msra.mxu0 0.0
      %468 = vmatprep.subr.mxu0 0.0
      %469 = vmatpush1.msra.mxu0 0.0
      %470 = vmatprep.subr.mxu0 0.0
      %471 = vmatpush1.msra.mxu0 0.0
      %472 = vmatprep.subr.mxu0 0.0
      %473 = vmatpush1.msra.mxu0 0.0
      %474 = vmatprep.subr.mxu0 0.0
      %475 = vmatpush1.msra.mxu0 0.0
      %476 = vmatprep.subr.mxu0 0.0
      %477 = vmatpush1.msra.mxu0 0.0
      %478 = vmatprep.subr.mxu0 0.0
      %479 = vmatpush1.msra.mxu0 0.0
      %480 = vmatprep.subr.mxu0 0.0
      %481 = vmatpush1.msra.mxu0 0.0
      %482 = vmatprep.mubr.f32.mxu0 0.0
      %483 = vmatmul.mubr.f32.gmra.mrb[0].mxu0 %v326
      %v484 = vpop.f32.mrb[0].mxu0
      %v485 = vadd.f32 %v317, %v484
      %v486 = vpop.f32.mrb[0].mxu0
      %487 = vmatprep.mubr.f32.mxu0 0.0
      %488 = vmatmul.mubr.f32.gmra.mrb[0].mxu0 %v329
      %v489 = vpop.f32.mrb[0].mxu0
      %v490 = vadd.f32 %v322, %v489
      %v491 = vpop.f32.mrb[0].mxu0
      %492 = vdwg.mxu0
      %v493 = vmax.f32 %v408, 0.0
      %v494 = vmax.f32 %v410, 0.0
      %v495 = vmax.f32 %v485, 0.0
      %v496 = vmax.f32 %v414, 0.0
      %v497 = vmax.f32 %v416, 0.0
      %v498 = vmax.f32 %v490, 0.0
      %v499 = vld [vmem:[%s3] sm:$0xff]
      %v500 = vld [vmem:[%s3 + $0x8] sm:$0xff]
      %v501 = vld [vmem:[%s3 + $0x10] sm:$0xff]
      %v502 = vld [vmem:[%s3 + $0x18] sm:$0xff]
      %v503 = vld [vmem:[%s4] sm:$0xff]
      %v504 = vld [vmem:[%s4 + $0x8] sm:$0xff]
      %v505 = vld [vmem:[%s4 + $0x10] sm:$0xff]
      %v506 = vld [vmem:[%s4 + $0x18] sm:$0xff]
      %508 = vset.pattern.permute.xlu0 0
      %509 = vperm.xlu0 %508, %v503
      %v510 = vpop.permute.xlu0 %509
      %513 = vset.pattern.permute.xlu0 0
      %514 = vperm.xlu0 %513, %v504
      %v515 = vpop.permute.xlu0 %514
      %518 = vset.pattern.permute.xlu0 0
      %519 = vperm.xlu0 %518, %v505
      %v520 = vpop.permute.xlu0 %519
      %523 = vset.pattern.permute.xlu0 0
      %524 = vperm.xlu0 %523, %v506
      %v525 = vpop.permute.xlu0 %524
      %vm527 = vcmask 130048
      %v529 = vsel %vm527, %v499, 0
      %v532 = vsel %vm527, %v500, 0
      %v535 = vsel %vm527, %v501, 0
      %v538 = vsel %vm527, %v502, 0
      %540 = vmatprep.subr.mxu0 %v494
      %541 = vmatpush1.msra.mxu0 %v493
      %542 = vmatprep.subr.mxu0 %v497
      %543 = vmatpush1.msra.mxu0 %v496
      %544 = vmatprep.subr.mxu0 0.0
      %545 = vmatpush1.msra.mxu0 0.0
      %546 = vmatprep.subr.mxu0 0.0
      %547 = vmatpush1.msra.mxu0 0.0
      %548 = vmatprep.subr.mxu0 0.0
      %549 = vmatpush1.msra.mxu0 0.0
      %550 = vmatprep.subr.mxu0 0.0
      %551 = vmatpush1.msra.mxu0 0.0
      %552 = vmatprep.subr.mxu0 0.0
      %553 = vmatpush1.msra.mxu0 0.0
      %554 = vmatprep.subr.mxu0 0.0
      %555 = vmatpush1.msra.mxu0 0.0
      %556 = vmatprep.subr.mxu0 0.0
      %557 = vmatpush1.msra.mxu0 0.0
      %558 = vmatprep.subr.mxu0 0.0
      %559 = vmatpush1.msra.mxu0 0.0
      %560 = vmatprep.subr.mxu0 0.0
      %561 = vmatpush1.msra.mxu0 0.0
      %562 = vmatprep.subr.mxu0 0.0
      %563 = vmatpush1.msra.mxu0 0.0
      %564 = vmatprep.subr.mxu0 0.0
      %565 = vmatpush1.msra.mxu0 0.0
      %566 = vmatprep.subr.mxu0 0.0
      %567 = vmatpush1.msra.mxu0 0.0
      %568 = vmatprep.subr.mxu0 0.0
      %569 = vmatpush1.msra.mxu0 0.0
      %570 = vmatprep.subr.mxu0 0.0
      %571 = vmatpush1.msra.mxu0 0.0
      %572 = vmatprep.subr.mxu0 0.0
      %573 = vmatpush1.msra.mxu0 0.0
      %574 = vmatprep.subr.mxu0 0.0
      %575 = vmatpush1.msra.mxu0 0.0
      %576 = vmatprep.subr.mxu0 0.0
      %577 = vmatpush1.msra.mxu0 0.0
      %578 = vmatprep.subr.mxu0 0.0
      %579 = vmatpush1.msra.mxu0 0.0
      %580 = vmatprep.subr.mxu0 0.0
      %581 = vmatpush1.msra.mxu0 0.0
      %582 = vmatprep.subr.mxu0 0.0
      %583 = vmatpush1.msra.mxu0 0.0
      %584 = vmatprep.subr.mxu0 0.0
      %585 = vmatpush1.msra.mxu0 0.0
      %586 = vmatprep.subr.mxu0 0.0
      %587 = vmatpush1.msra.mxu0 0.0
      %588 = vmatprep.subr.mxu0 0.0
      %589 = vmatpush1.msra.mxu0 0.0
      %590 = vmatprep.subr.mxu0 0.0
      %591 = vmatpush1.msra.mxu0 0.0
      %592 = vmatprep.subr.mxu0 0.0
      %593 = vmatpush1.msra.mxu0 0.0
      %594 = vmatprep.subr.mxu0 0.0
      %595 = vmatpush1.msra.mxu0 0.0
      %596 = vmatprep.subr.mxu0 0.0
      %597 = vmatpush1.msra.mxu0 0.0
      %598 = vmatprep.subr.mxu0 0.0
      %599 = vmatpush1.msra.mxu0 0.0
      %600 = vmatprep.subr.mxu0 0.0
      %601 = vmatpush1.msra.mxu0 0.0
      %602 = vmatprep.subr.mxu0 0.0
      %603 = vmatpush1.msra.mxu0 0.0
      %604 = vmatprep.mubr.f32.mxu0 0.0
      %605 = vmatmul.mubr.f32.gmra.mrb[0].mxu0 %v529
      %v606 = vpop.f32.mrb[0].mxu0
      %v607 = vadd.f32 %v510, %v606
      %v608 = vpop.f32.mrb[0].mxu0
      %v609 = vadd.f32 %v510, %v608
      %610 = vmatprep.mubr.f32.mxu0 0.0
      %611 = vmatmul.mubr.f32.gmra.mrb[0].mxu0 %v532
      %v612 = vpop.f32.mrb[0].mxu0
      %v613 = vadd.f32 %v515, %v612
      %v614 = vpop.f32.mrb[0].mxu0
      %v615 = vadd.f32 %v515, %v614
      %616 = vmatprep.mubr.f32.mxu0 0.0
      %617 = vmatmul.mubr.f32.gmra.mrb[0].mxu0 %v535
      %v618 = vpop.f32.mrb[0].mxu0
      %v619 = vadd.f32 %v520, %v618
      %v620 = vpop.f32.mrb[0].mxu0
      %v621 = vadd.f32 %v520, %v620
      %622 = vmatprep.mubr.f32.mxu0 0.0
      %623 = vmatmul.mubr.f32.gmra.mrb[0].mxu0 %v538
      %v624 = vpop.f32.mrb[0].mxu0
      %v625 = vadd.f32 %v525, %v624
      %v626 = vpop.f32.mrb[0].mxu0
      %v627 = vadd.f32 %v525, %v626
      %628 = vdwg.mxu0
      %629 = vmatprep.subr.mxu0 0.0
      %630 = vmatpush1.msra.mxu0 %v495
      %631 = vmatprep.subr.mxu0 0.0
      %632 = vmatpush1.msra.mxu0 %v498
      %633 = vmatprep.subr.mxu0 0.0
      %634 = vmatpush1.msra.mxu0 0.0
      %635 = vmatprep.subr.mxu0 0.0
      %636 = vmatpush1.msra.mxu0 0.0
      %637 = vmatprep.subr.mxu0 0.0
      %638 = vmatpush1.msra.mxu0 0.0
      %639 = vmatprep.subr.mxu0 0.0
      %640 = vmatpush1.msra.mxu0 0.0
      %641 = vmatprep.subr.mxu0 0.0
      %642 = vmatpush1.msra.mxu0 0.0
      %643 = vmatprep.subr.mxu0 0.0
      %644 = vmatpush1.msra.mxu0 0.0
      %645 = vmatprep.subr.mxu0 0.0
      %646 = vmatpush1.msra.mxu0 0.0
      %647 = vmatprep.subr.mxu0 0.0
      %648 = vmatpush1.msra.mxu0 0.0
      %649 = vmatprep.subr.mxu0 0.0
      %650 = vmatpush1.msra.mxu0 0.0
      %651 = vmatprep.subr.mxu0 0.0
      %652 = vmatpush1.msra.mxu0 0.0
      %653 = vmatprep.subr.mxu0 0.0
      %654 = vmatpush1.msra.mxu0 0.0
      %655 = vmatprep.subr.mxu0 0.0
      %656 = vmatpush1.msra.mxu0 0.0
      %657 = vmatprep.subr.mxu0 0.0
      %658 = vmatpush1.msra.mxu0 0.0
      %659 = vmatprep.subr.mxu0 0.0
      %660 = vmatpush1.msra.mxu0 0.0
      %661 = vmatprep.subr.mxu0 0.0
      %662 = vmatpush1.msra.mxu0 0.0
      %663 = vmatprep.subr.mxu0 0.0
      %664 = vmatpush1.msra.mxu0 0.0
      %665 = vmatprep.subr.mxu0 0.0
      %666 = vmatpush1.msra.mxu0 0.0
      %667 = vmatprep.subr.mxu0 0.0
      %668 = vmatpush1.msra.mxu0 0.0
      %669 = vmatprep.subr.mxu0 0.0
      %670 = vmatpush1.msra.mxu0 0.0
      %671 = vmatprep.subr.mxu0 0.0
      %672 = vmatpush1.msra.mxu0 0.0
      %673 = vmatprep.subr.mxu0 0.0
      %674 = vmatpush1.msra.mxu0 0.0
      %675 = vmatprep.subr.mxu0 0.0
      %676 = vmatpush1.msra.mxu0 0.0
      %677 = vmatprep.subr.mxu0 0.0
      %678 = vmatpush1.msra.mxu0 0.0
      %679 = vmatprep.subr.mxu0 0.0
      %680 = vmatpush1.msra.mxu0 0.0
      %681 = vmatprep.subr.mxu0 0.0
      %682 = vmatpush1.msra.mxu0 0.0
      %683 = vmatprep.subr.mxu0 0.0
      %684 = vmatpush1.msra.mxu0 0.0
      %685 = vmatprep.subr.mxu0 0.0
      %686 = vmatpush1.msra.mxu0 0.0
      %687 = vmatprep.subr.mxu0 0.0
      %688 = vmatpush1.msra.mxu0 0.0
      %689 = vmatprep.subr.mxu0 0.0
      %690 = vmatpush1.msra.mxu0 0.0
      %691 = vmatprep.subr.mxu0 0.0
      %692 = vmatpush1.msra.mxu0 0.0
      %693 = vmatprep.mubr.f32.mxu0 0.0
      %694 = vmatmul.mubr.f32.gmra.mrb[0].mxu0 %v529
      %v695 = vpop.f32.mrb[0].mxu0
      %v696 = vadd.f32 %v510, %v695
      %v697 = vpop.f32.mrb[0].mxu0
      %698 = vmatprep.mubr.f32.mxu0 0.0
      %699 = vmatmul.mubr.f32.gmra.mrb[0].mxu0 %v532
      %v700 = vpop.f32.mrb[0].mxu0
      %v701 = vadd.f32 %v515, %v700
      %v702 = vpop.f32.mrb[0].mxu0
      %703 = vmatprep.mubr.f32.mxu0 0.0
      %704 = vmatmul.mubr.f32.gmra.mrb[0].mxu0 %v535
      %v705 = vpop.f32.mrb[0].mxu0
      %v706 = vadd.f32 %v520, %v705
      %v707 = vpop.f32.mrb[0].mxu0
      %708 = vmatprep.mubr.f32.mxu0 0.0
      %709 = vmatmul.mubr.f32.gmra.mrb[0].mxu0 %v538
      %v710 = vpop.f32.mrb[0].mxu0
      %v711 = vadd.f32 %v525, %v710
      %v712 = vpop.f32.mrb[0].mxu0
      %713 = vdwg.mxu0
      %v714 = vmax.f32 %v607, 0.0
      %v715 = vmax.f32 %v609, 0.0
      %v716 = vmax.f32 %v696, 0.0
      %v717 = vmax.f32 %v613, 0.0
      %v718 = vmax.f32 %v615, 0.0
      %v719 = vmax.f32 %v701, 0.0
      %v720 = vmax.f32 %v619, 0.0
      %v721 = vmax.f32 %v621, 0.0
      %v722 = vmax.f32 %v706, 0.0
      %v723 = vmax.f32 %v625, 0.0
      %v724 = vmax.f32 %v627, 0.0
      %v725 = vmax.f32 %v711, 0.0
      %v726 = vld [vmem:[%s5] sm:$0xff]
      %v727 = vld [vmem:[%s5 + $0x8] sm:$0xff]
      %v728 = vld [vmem:[%s5 + $0x10] sm:$0xff]
      %v729 = vld [vmem:[%s5 + $0x18] sm:$0xff]
      %v730 = vld [vmem:[%s5 + $0x20] sm:$0xff]
      %v731 = vld [vmem:[%s5 + $0x28] sm:$0xff]
      %v732 = vld [vmem:[%s5 + $0x30] sm:$0xff]
      %v733 = vld [vmem:[%s5 + $0x38] sm:$0xff]
      %v734 = vld [vmem:[%s6] sm:$0xff]
      %v735 = vld [vmem:[%s6 + $0x8] sm:$0xff]
      %v736 = vld [vmem:[%s6 + $0x10] sm:$0xff]
      %v737 = vld [vmem:[%s6 + $0x18] sm:$0xff]
      %v738 = vld [vmem:[%s6 + $0x20] sm:$0xff]
      %v739 = vld [vmem:[%s6 + $0x28] sm:$0xff]
      %v740 = vld [vmem:[%s6 + $0x30] sm:$0xff]
      %v741 = vld [vmem:[%s6 + $0x38] sm:$0xff]
      %743 = vset.pattern.permute.xlu0 0
      %744 = vperm.xlu0 %743, %v734
      %v745 = vpop.permute.xlu0 %744
      %748 = vset.pattern.permute.xlu0 0
      %749 = vperm.xlu0 %748, %v735
      %v750 = vpop.permute.xlu0 %749
      %753 = vset.pattern.permute.xlu0 0
      %754 = vperm.xlu0 %753, %v736
      %v755 = vpop.permute.xlu0 %754
      %758 = vset.pattern.permute.xlu0 0
      %759 = vperm.xlu0 %758, %v737
      %v760 = vpop.permute.xlu0 %759
      %763 = vset.pattern.permute.xlu0 0
      %764 = vperm.xlu0 %763, %v738
      %v765 = vpop.permute.xlu0 %764
      %768 = vset.pattern.permute.xlu0 0
      %769 = vperm.xlu0 %768, %v739
      %v770 = vpop.permute.xlu0 %769
      %773 = vset.pattern.permute.xlu0 0
      %774 = vperm.xlu0 %773, %v740
      %v775 = vpop.permute.xlu0 %774
      %778 = vset.pattern.permute.xlu0 0
      %779 = vperm.xlu0 %778, %v741
      %v780 = vpop.permute.xlu0 %779
      %vm782 = vcmask 261120
      %v784 = vsel %vm782, %v726, 0
      %v787 = vsel %vm782, %v727, 0
      %v790 = vsel %vm782, %v728, 0
      %v793 = vsel %vm782, %v729, 0
      %v796 = vsel %vm782, %v730, 0
      %v799 = vsel %vm782, %v731, 0
      %v802 = vsel %vm782, %v732, 0
      %v805 = vsel %vm782, %v733, 0
      %807 = vmatprep.subr.mxu0 %v715
      %808 = vmatpush1.msra.mxu0 %v714
      %809 = vmatprep.subr.mxu0 %v718
      %810 = vmatpush1.msra.mxu0 %v717
      %811 = vmatprep.subr.mxu0 %v721
      %812 = vmatpush1.msra.mxu0 %v720
      %813 = vmatprep.subr.mxu0 %v724
      %814 = vmatpush1.msra.mxu0 %v723
      %815 = vmatprep.subr.mxu0 0.0
      %816 = vmatpush1.msra.mxu0 0.0
      %817 = vmatprep.subr.mxu0 0.0
      %818 = vmatpush1.msra.mxu0 0.0
      %819 = vmatprep.subr.mxu0 0.0
      %820 = vmatpush1.msra.mxu0 0.0
      %821 = vmatprep.subr.mxu0 0.0
      %822 = vmatpush1.msra.mxu0 0.0
      %823 = vmatprep.subr.mxu0 0.0
      %824 = vmatpush1.msra.mxu0 0.0
      %825 = vmatprep.subr.mxu0 0.0
      %826 = vmatpush1.msra.mxu0 0.0
      %827 = vmatprep.subr.mxu0 0.0
      %828 = vmatpush1.msra.mxu0 0.0
      %829 = vmatprep.subr.mxu0 0.0
      %830 = vmatpush1.msra.mxu0 0.0
      %831 = vmatprep.subr.mxu0 0.0
      %832 = vmatpush1.msra.mxu0 0.0
      %833 = vmatprep.subr.mxu0 0.0
      %834 = vmatpush1.msra.mxu0 0.0
      %835 = vmatprep.subr.mxu0 0.0
      %836 = vmatpush1.msra.mxu0 0.0
      %837 = vmatprep.subr.mxu0 0.0
      %838 = vmatpush1.msra.mxu0 0.0
      %839 = vmatprep.subr.mxu0 0.0
      %840 = vmatpush1.msra.mxu0 0.0
      %841 = vmatprep.subr.mxu0 0.0
      %842 = vmatpush1.msra.mxu0 0.0
      %843 = vmatprep.subr.mxu0 0.0
      %844 = vmatpush1.msra.mxu0 0.0
      %845 = vmatprep.subr.mxu0 0.0
      %846 = vmatpush1.msra.mxu0 0.0
      %847 = vmatprep.subr.mxu0 0.0
      %848 = vmatpush1.msra.mxu0 0.0
      %849 = vmatprep.subr.mxu0 0.0
      %850 = vmatpush1.msra.mxu0 0.0
      %851 = vmatprep.subr.mxu0 0.0
      %852 = vmatpush1.msra.mxu0 0.0
      %853 = vmatprep.subr.mxu0 0.0
      %854 = vmatpush1.msra.mxu0 0.0
      %855 = vmatprep.subr.mxu0 0.0
      %856 = vmatpush1.msra.mxu0 0.0
      %857 = vmatprep.subr.mxu0 0.0
      %858 = vmatpush1.msra.mxu0 0.0
      %859 = vmatprep.subr.mxu0 0.0
      %860 = vmatpush1.msra.mxu0 0.0
      %861 = vmatprep.subr.mxu0 0.0
      %862 = vmatpush1.msra.mxu0 0.0
      %863 = vmatprep.subr.mxu0 0.0
      %864 = vmatpush1.msra.mxu0 0.0
      %865 = vmatprep.subr.mxu0 0.0
      %866 = vmatpush1.msra.mxu0 0.0
      %867 = vmatprep.subr.mxu0 0.0
      %868 = vmatpush1.msra.mxu0 0.0
      %869 = vmatprep.subr.mxu0 0.0
      %870 = vmatpush1.msra.mxu0 0.0
      %871 = vmatprep.mubr.f32.mxu0 0.0
      %872 = vmatmul.mubr.f32.gmra.mrb[0].mxu0 %v784
      %v873 = vpop.f32.mrb[0].mxu0
      %v874 = vadd.f32 %v745, %v873
      %v875 = vpop.f32.mrb[0].mxu0
      %v876 = vadd.f32 %v745, %v875
      %877 = vmatprep.mubr.f32.mxu0 0.0
      %878 = vmatmul.mubr.f32.gmra.mrb[0].mxu0 %v787
      %v879 = vpop.f32.mrb[0].mxu0
      %v880 = vadd.f32 %v750, %v879
      %v881 = vpop.f32.mrb[0].mxu0
      %v882 = vadd.f32 %v750, %v881
      %883 = vmatprep.mubr.f32.mxu0 0.0
      %884 = vmatmul.mubr.f32.gmra.mrb[0].mxu0 %v790
      %v885 = vpop.f32.mrb[0].mxu0
      %v886 = vadd.f32 %v755, %v885
      %v887 = vpop.f32.mrb[0].mxu0
      %v888 = vadd.f32 %v755, %v887
      %889 = vmatprep.mubr.f32.mxu0 0.0
      %890 = vmatmul.mubr.f32.gmra.mrb[0].mxu0 %v793
      %v891 = vpop.f32.mrb[0].mxu0
      %v892 = vadd.f32 %v760, %v891
      %v893 = vpop.f32.mrb[0].mxu0
      %v894 = vadd.f32 %v760, %v893
      %895 = vmatprep.mubr.f32.mxu0 0.0
      %896 = vmatmul.mubr.f32.gmra.mrb[0].mxu0 %v796
      %v897 = vpop.f32.mrb[0].mxu0
      %v898 = vadd.f32 %v765, %v897
      %v899 = vpop.f32.mrb[0].mxu0
      %v900 = vadd.f32 %v765, %v899
      %901 = vmatprep.mubr.f32.mxu0 0.0
      %902 = vmatmul.mubr.f32.gmra.mrb[0].mxu0 %v799
      %v903 = vpop.f32.mrb[0].mxu0
      %v904 = vadd.f32 %v770, %v903
      %v905 = vpop.f32.mrb[0].mxu0
      %v906 = vadd.f32 %v770, %v905
      %907 = vmatprep.mubr.f32.mxu0 0.0
      %908 = vmatmul.mubr.f32.gmra.mrb[0].mxu0 %v802
      %v909 = vpop.f32.mrb[0].mxu0
      %v910 = vadd.f32 %v775, %v909
      %v911 = vpop.f32.mrb[0].mxu0
      %v912 = vadd.f32 %v775, %v911
      %913 = vmatprep.mubr.f32.mxu0 0.0
      %914 = vmatmul.mubr.f32.gmra.mrb[0].mxu0 %v805
      %v915 = vpop.f32.mrb[0].mxu0
      %v916 = vadd.f32 %v780, %v915
      %v917 = vpop.f32.mrb[0].mxu0
      %v918 = vadd.f32 %v780, %v917
      %919 = vdwg.mxu0
      %920 = vmatprep.subr.mxu0 0.0
      %921 = vmatpush1.msra.mxu0 %v716
      %922 = vmatprep.subr.mxu0 0.0
      %923 = vmatpush1.msra.mxu0 %v719
      %924 = vmatprep.subr.mxu0 0.0
      %925 = vmatpush1.msra.mxu0 %v722
      %926 = vmatprep.subr.mxu0 0.0
      %927 = vmatpush1.msra.mxu0 %v725
      %928 = vmatprep.subr.mxu0 0.0
      %929 = vmatpush1.msra.mxu0 0.0
      %930 = vmatprep.subr.mxu0 0.0
      %931 = vmatpush1.msra.mxu0 0.0
      %932 = vmatprep.subr.mxu0 0.0
      %933 = vmatpush1.msra.mxu0 0.0
      %934 = vmatprep.subr.mxu0 0.0
      %935 = vmatpush1.msra.mxu0 0.0
      %936 = vmatprep.subr.mxu0 0.0
      %937 = vmatpush1.msra.mxu0 0.0
      %938 = vmatprep.subr.mxu0 0.0
      %939 = vmatpush1.msra.mxu0 0.0
      %940 = vmatprep.subr.mxu0 0.0
      %941 = vmatpush1.msra.mxu0 0.0
      %942 = vmatprep.subr.mxu0 0.0
      %943 = vmatpush1.msra.mxu0 0.0
      %944 = vmatprep.subr.mxu0 0.0
      %945 = vmatpush1.msra.mxu0 0.0
      %946 = vmatprep.subr.mxu0 0.0
      %947 = vmatpush1.msra.mxu0 0.0
      %948 = vmatprep.subr.mxu0 0.0
      %949 = vmatpush1.msra.mxu0 0.0
      %950 = vmatprep.subr.mxu0 0.0
      %951 = vmatpush1.msra.mxu0 0.0
      %952 = vmatprep.subr.mxu0 0.0
      %953 = vmatpush1.msra.mxu0 0.0
      %954 = vmatprep.subr.mxu0 0.0
      %955 = vmatpush1.msra.mxu0 0.0
      %956 = vmatprep.subr.mxu0 0.0
      %957 = vmatpush1.msra.mxu0 0.0
      %958 = vmatprep.subr.mxu0 0.0
      %959 = vmatpush1.msra.mxu0 0.0
      %960 = vmatprep.subr.mxu0 0.0
      %961 = vmatpush1.msra.mxu0 0.0
      %962 = vmatprep.subr.mxu0 0.0
      %963 = vmatpush1.msra.mxu0 0.0
      %964 = vmatprep.subr.mxu0 0.0
      %965 = vmatpush1.msra.mxu0 0.0
      %966 = vmatprep.subr.mxu0 0.0
      %967 = vmatpush1.msra.mxu0 0.0
      %968 = vmatprep.subr.mxu0 0.0
      %969 = vmatpush1.msra.mxu0 0.0
      %970 = vmatprep.subr.mxu0 0.0
      %971 = vmatpush1.msra.mxu0 0.0
      %972 = vmatprep.subr.mxu0 0.0
      %973 = vmatpush1.msra.mxu0 0.0
      %974 = vmatprep.subr.mxu0 0.0
      %975 = vmatpush1.msra.mxu0 0.0
      %976 = vmatprep.subr.mxu0 0.0
      %977 = vmatpush1.msra.mxu0 0.0
      %978 = vmatprep.subr.mxu0 0.0
      %979 = vmatpush1.msra.mxu0 0.0
      %980 = vmatprep.subr.mxu0 0.0
      %981 = vmatpush1.msra.mxu0 0.0
      %982 = vmatprep.subr.mxu0 0.0
      %983 = vmatpush1.msra.mxu0 0.0
      %984 = vmatprep.mubr.f32.mxu0 0.0
      %985 = vmatmul.mubr.f32.gmra.mrb[0].mxu0 %v784
      %v986 = vpop.f32.mrb[0].mxu0
      %v987 = vadd.f32 %v745, %v986
      %v988 = vpop.f32.mrb[0].mxu0
      %989 = vmatprep.mubr.f32.mxu0 0.0
      %990 = vmatmul.mubr.f32.gmra.mrb[0].mxu0 %v787
      %v991 = vpop.f32.mrb[0].mxu0
      %v992 = vadd.f32 %v750, %v991
      %v993 = vpop.f32.mrb[0].mxu0
      %994 = vmatprep.mubr.f32.mxu0 0.0
      %995 = vmatmul.mubr.f32.gmra.mrb[0].mxu0 %v790
      %v996 = vpop.f32.mrb[0].mxu0
      %v997 = vadd.f32 %v755, %v996
      %v998 = vpop.f32.mrb[0].mxu0
      %999 = vmatprep.mubr.f32.mxu0 0.0
      %1000 = vmatmul.mubr.f32.gmra.mrb[0].mxu0 %v793
      %v1001 = vpop.f32.mrb[0].mxu0
      %v1002 = vadd.f32 %v760, %v1001
      %v1003 = vpop.f32.mrb[0].mxu0
      %1004 = vmatprep.mubr.f32.mxu0 0.0
      %1005 = vmatmul.mubr.f32.gmra.mrb[0].mxu0 %v796
      %v1006 = vpop.f32.mrb[0].mxu0
      %v1007 = vadd.f32 %v765, %v1006
      %v1008 = vpop.f32.mrb[0].mxu0
      %1009 = vmatprep.mubr.f32.mxu0 0.0
      %1010 = vmatmul.mubr.f32.gmra.mrb[0].mxu0 %v799
      %v1011 = vpop.f32.mrb[0].mxu0
      %v1012 = vadd.f32 %v770, %v1011
      %v1013 = vpop.f32.mrb[0].mxu0
      %1014 = vmatprep.mubr.f32.mxu0 0.0
      %1015 = vmatmul.mubr.f32.gmra.mrb[0].mxu0 %v802
      %v1016 = vpop.f32.mrb[0].mxu0
      %v1017 = vadd.f32 %v775, %v1016
      %v1018 = vpop.f32.mrb[0].mxu0
      %1019 = vmatprep.mubr.f32.mxu0 0.0
      %1020 = vmatmul.mubr.f32.gmra.mrb[0].mxu0 %v805
      %v1021 = vpop.f32.mrb[0].mxu0
      %v1022 = vadd.f32 %v780, %v1021
      %v1023 = vpop.f32.mrb[0].mxu0
      %1024 = vdwg.mxu0
      %v1025 = vmax.f32 %v874, 0.0
      %v1026 = vmax.f32 %v876, 0.0
      %v1027 = vmax.f32 %v987, 0.0
      %v1028 = vmax.f32 %v880, 0.0
      %v1029 = vmax.f32 %v882, 0.0
      %v1030 = vmax.f32 %v992, 0.0
      %v1031 = vmax.f32 %v886, 0.0
      %v1032 = vmax.f32 %v888, 0.0
      %v1033 = vmax.f32 %v997, 0.0
      %v1034 = vmax.f32 %v892, 0.0
      %v1035 = vmax.f32 %v894, 0.0
      %v1036 = vmax.f32 %v1002, 0.0
      %v1037 = vmax.f32 %v898, 0.0
      %v1038 = vmax.f32 %v900, 0.0
      %v1039 = vmax.f32 %v1007, 0.0
      %v1040 = vmax.f32 %v904, 0.0
      %v1041 = vmax.f32 %v906, 0.0
      %v1042 = vmax.f32 %v1012, 0.0
      %v1043 = vmax.f32 %v910, 0.0
      %v1044 = vmax.f32 %v912, 0.0
      %v1045 = vmax.f32 %v1017, 0.0
      %v1046 = vmax.f32 %v916, 0.0
      %v1047 = vmax.f32 %v918, 0.0
      %v1048 = vmax.f32 %v1022, 0.0
      %v1049 = vlaneseq
      %v1050 = vand.u32 %v1049, 127
      %v1051 = vadd.s32 %v1050, 128
      %v1052 = vadd.s32 %v1050, 256
      %s1053 = smul.u32 %s23, 384
      %v1054 = vstv %s1053
      %v1055 = vadd.s32 %v1054, %v1050
      %v1056 = vadd.s32 %v1054, %v1051
      %v1057 = vadd.s32 %v1054, %v1052
      %vm1058 = vcmp.lt.s32.totalorder %v1055, 300
      %vm1059 = vcmp.lt.s32.totalorder %v1056, 300
      %vm1060 = vcmp.lt.s32.totalorder %v1057, 300
      %v1061 = vsel %vm1058, %v1025, 0.0
      %v1062 = vsel %vm1059, %v1026, 0.0
      %v1063 = vsel %vm1060, %v1027, 0.0
      %v1064 = vsel %vm1058, %v1028, 0.0
      %v1065 = vsel %vm1059, %v1029, 0.0
      %v1066 = vsel %vm1060, %v1030, 0.0
      %v1067 = vsel %vm1058, %v1031, 0.0
      %v1068 = vsel %vm1059, %v1032, 0.0
      %v1069 = vsel %vm1060, %v1033, 0.0
      %v1070 = vsel %vm1058, %v1034, 0.0
      %v1071 = vsel %vm1059, %v1035, 0.0
      %v1072 = vsel %vm1060, %v1036, 0.0
      %v1073 = vsel %vm1058, %v1037, 0.0
      %v1074 = vsel %vm1059, %v1038, 0.0
      %v1075 = vsel %vm1060, %v1039, 0.0
      %v1076 = vsel %vm1058, %v1040, 0.0
      %v1077 = vsel %vm1059, %v1041, 0.0
      %v1078 = vsel %vm1060, %v1042, 0.0
      %v1079 = vsel %vm1058, %v1043, 0.0
      %v1080 = vsel %vm1059, %v1044, 0.0
      %v1081 = vsel %vm1060, %v1045, 0.0
      %v1082 = vsel %vm1058, %v1046, 0.0
      %v1083 = vsel %vm1059, %v1047, 0.0
      %v1084 = vsel %vm1060, %v1048, 0.0
      %v1085 = vmax.f32 %v1061, %v1062
      %v1086 = vmax.f32 %v1064, %v1065
      %v1087 = vmax.f32 %v1067, %v1068
      %v1088 = vmax.f32 %v1070, %v1071
      %v1089 = vmax.f32 %v1073, %v1074
      %v1090 = vmax.f32 %v1076, %v1077
      %v1091 = vmax.f32 %v1079, %v1080
      %v1092 = vmax.f32 %v1082, %v1083
      %v1093 = vmax.f32 %v1085, %v1063
      %v1094 = vmax.f32 %v1086, %v1066
      %v1095 = vmax.f32 %v1087, %v1069
      %v1096 = vmax.f32 %v1088, %v1072
      %v1097 = vmax.f32 %v1089, %v1075
      %v1098 = vmax.f32 %v1090, %v1078
      %v1099 = vmax.f32 %v1091, %v1081
      %v1100 = vmax.f32 %v1092, %v1084
      %p1101 = scmp.eq.s32.totalorder %s23, 0
      // Predicated region
      $region49: #{pointnet_feat_forward.2} parent=47 // pred_check
        %p1102 = pneg %p1101
      $region50: #{pointnet_feat_forward.2} parent=47 // pred_check_branch
        %1104 = sbr.rel (%p1102) target = $region52
      $region51: #{pointnet_feat_forward.2} parent=47 // pred_region
        %1105 = vst [vmem:[#allocation2] sm:$0xff] %v1093
        %1106 = vst [vmem:[#allocation2 + $0x8] sm:$0xff] %v1094
        %1107 = vst [vmem:[#allocation2 + $0x10] sm:$0xff] %v1095
        %1108 = vst [vmem:[#allocation2 + $0x18] sm:$0xff] %v1096
        %1109 = vst [vmem:[#allocation2 + $0x20] sm:$0xff] %v1097
        %1110 = vst [vmem:[#allocation2 + $0x28] sm:$0xff] %v1098
        %1111 = vst [vmem:[#allocation2 + $0x30] sm:$0xff] %v1099
        %1112 = vst [vmem:[#allocation2 + $0x38] sm:$0xff] %v1100
      $region52: #{pointnet_feat_forward.2} parent=47 // pred_fallthru
        _
      %p1113 = scmp.ne.s32.totalorder %s23, 0
      // Predicated region
      $region53: #{pointnet_feat_forward.2} parent=47 // pred_check
        %p1114 = pneg %p1113
      $region54: #{pointnet_feat_forward.2} parent=47 // pred_check_branch
        %1116 = sbr.rel (%p1114) target = $region56
      $region55: #{pointnet_feat_forward.2} parent=47 // pred_region
        %v1117 = vld [vmem:[#allocation2] sm:$0xff]
        %v1118 = vld [vmem:[#allocation2 + $0x8] sm:$0xff]
        %v1119 = vld [vmem:[#allocation2 + $0x10] sm:$0xff]
        %v1120 = vld [vmem:[#allocation2 + $0x18] sm:$0xff]
        %v1121 = vld [vmem:[#allocation2 + $0x20] sm:$0xff]
        %v1122 = vld [vmem:[#allocation2 + $0x28] sm:$0xff]
        %v1123 = vld [vmem:[#allocation2 + $0x30] sm:$0xff]
        %v1124 = vld [vmem:[#allocation2 + $0x38] sm:$0xff]
        %v1125 = vmax.f32 %v1117, %v1093
        %v1126 = vmax.f32 %v1118, %v1094
        %v1127 = vmax.f32 %v1119, %v1095
        %v1128 = vmax.f32 %v1120, %v1096
        %v1129 = vmax.f32 %v1121, %v1097
        %v1130 = vmax.f32 %v1122, %v1098
        %v1131 = vmax.f32 %v1123, %v1099
        %v1132 = vmax.f32 %v1124, %v1100
        %1133 = vst [vmem:[#allocation2] sm:$0xff] %v1125
        %1134 = vst [vmem:[#allocation2 + $0x8] sm:$0xff] %v1126
        %1135 = vst [vmem:[#allocation2 + $0x10] sm:$0xff] %v1127
        %1136 = vst [vmem:[#allocation2 + $0x18] sm:$0xff] %v1128
        %1137 = vst [vmem:[#allocation2 + $0x20] sm:$0xff] %v1129
        %1138 = vst [vmem:[#allocation2 + $0x28] sm:$0xff] %v1130
        %1139 = vst [vmem:[#allocation2 + $0x30] sm:$0xff] %v1131
        %1140 = vst [vmem:[#allocation2 + $0x38] sm:$0xff] %v1132
      $region56: #{pointnet_feat_forward.2} parent=47 // pred_fallthru
        _
      // Predicated region
      $region57: #{pointnet_feat_forward.2} parent=47 // pred_check
        %p1141 = pneg %p1101
      $region58: #{pointnet_feat_forward.2} parent=47 // pred_check_branch
        %1143 = sbr.rel (%p1141) target = $region60
      $region59: #{pointnet_feat_forward.2} parent=47 // pred_region
        %v1144 = vld [vmem:[#allocation2] sm:$0xff]
        %v1145 = vld [vmem:[#allocation2 + $0x8] sm:$0xff]
        %v1146 = vld [vmem:[#allocation2 + $0x10] sm:$0xff]
        %v1147 = vld [vmem:[#allocation2 + $0x18] sm:$0xff]
        %v1148 = vld [vmem:[#allocation2 + $0x20] sm:$0xff]
        %v1149 = vld [vmem:[#allocation2 + $0x28] sm:$0xff]
        %v1150 = vld [vmem:[#allocation2 + $0x30] sm:$0xff]
        %v1151 = vld [vmem:[#allocation2 + $0x38] sm:$0xff]
        %1152 = vmax.xlane.f32.xlu0 %v1144
        %v1153 = vpop.xlane.xlu0 %1152
        %1154 = vmax.xlane.f32.xlu0 %v1145
        %v1155 = vpop.xlane.xlu0 %1154
        %1156 = vmax.xlane.f32.xlu0 %v1146
        %v1157 = vpop.xlane.xlu0 %1156
        %1158 = vmax.xlane.f32.xlu0 %v1147
        %v1159 = vpop.xlane.xlu0 %1158
        %1160 = vmax.xlane.f32.xlu0 %v1148
        %v1161 = vpop.xlane.xlu0 %1160
        %1162 = vmax.xlane.f32.xlu0 %v1149
        %v1163 = vpop.xlane.xlu0 %1162
        %1164 = vmax.xlane.f32.xlu0 %v1150
        %v1165 = vpop.xlane.xlu0 %1164
        %1166 = vmax.xlane.f32.xlu0 %v1151
        %v1167 = vpop.xlane.xlu0 %1166
        %vm1168 = vcmask 7168
        %1169 = vst.msk [vmem:[%s306] sm:$0xff] %vm1168, %v1153
        %1170 = vst.msk [vmem:[%s306 + $0x8] sm:$0xff] %vm1168, %v1155
        %1171 = vst.msk [vmem:[%s306 + $0x10] sm:$0xff] %vm1168, %v1157
        %1172 = vst.msk [vmem:[%s306 + $0x18] sm:$0xff] %vm1168, %v1159
        %1173 = vst.msk [vmem:[%s306 + $0x20] sm:$0xff] %vm1168, %v1161
        %1174 = vst.msk [vmem:[%s306 + $0x28] sm:$0xff] %vm1168, %v1163
        %1175 = vst.msk [vmem:[%s306 + $0x30] sm:$0xff] %vm1168, %v1165
        %1176 = vst.msk [vmem:[%s306 + $0x38] sm:$0xff] %vm1168, %v1167
      $region60: #{pointnet_feat_forward.2} parent=47 // pred_fallthru
        _
      %p1177 = scmp.lt.s32.totalorder %s22, 1
      %s1178 = scalar_select %p1177, %s22, 1
      %s1179 = smul.addr %s1178, 8
      %s1180 = smul.addr %s1179, 8
      %s1181 = scalar_lea.vmem %s7, %s1180
      // Predicated region
      $region61: #{pointnet_feat_forward.2} parent=47 // pred_check
        %p1182 = pneg %p202
      $region62: #{pointnet_feat_forward.2} parent=47 // pred_check_branch
        %1184 = sbr.rel (%p1182) target = $region64
      $region63: #{pointnet_feat_forward.2} parent=47 // pred_region
        _
      $region64: #{pointnet_feat_forward.2} parent=47 // pred_fallthru
        _
    $region48: #{pointnet_feat_forward.2} parent=5 // pred_fallthru
      _
    %p1185 = scmp.le.s32.totalorder 2, %s13
    // Predicated region
    $region65: #{pointnet_feat_forward.2} parent=5 // pred_check
      %p1186 = pneg %p1185
    $region66: #{pointnet_feat_forward.2} parent=5 // pred_check_branch
      %1188 = sbr.rel (%p1186) target = $region68
    $region67: #{pointnet_feat_forward.2} parent=5 // pred_region
      %s1189 = ssub.s32 %s13, 2
      // Predicated region
      $region69: #{pointnet_feat_forward.2} parent=67 // pred_check
        %p1190 = pneg %p208
      $region70: #{pointnet_feat_forward.2} parent=67 // pred_check_branch
        %1192 = sbr.rel (%p1190) target = $region72
      $region71: #{pointnet_feat_forward.2} parent=67 // pred_region
        %p1193 = scmp.lt.s32.totalorder %s24, 1
        %s1194 = scalar_select %p1193, %s24, 1
        %s1195 = smul.addr %s1194, 8
        %s1196 = smul.addr %s1195, 8
        %s1197 = scalar_lea.vmem %s7, %s1196
      $region72: #{pointnet_feat_forward.2} parent=67 // pred_fallthru
        _
    $region68: #{pointnet_feat_forward.2} parent=5 // pred_fallthru
      _
  $region6: #{pointnet_feat_forward.2} parent=0 // loop_footer
    %s17 = sadd.s32 1, %s13
  $region7: #{pointnet_feat_forward.2} parent=0 // loop_footer_branch
    %12 = sbr.rel target = $region3
  $region8: #{pointnet_feat_forward.2} parent=0 // loop_exit
    _

// kernel: pointnet_feat_forward.3
$region0: #{pointnet_feat_forward.3}
  #allocation0 [shape = 'u32[]', space=smem, size = 0x4, offset = 0x4, fixed_abs, tag = 'smem constant byte address 0x4 - core index']
  #allocation1 [shape = 'u32[144,128]{1,0:T(1,128)}', space=vmem, size = 0x12000, scoped, tag = 'internal scratch']
  #allocation2 [shape = 'f32[64,128]{1,0:T(8,128)}', space=vmem, size = 0x8000, scoped, tag = 'scratch operand']
  %s0 = inlined_call_operand.vmem [shape: f32[2,6,300], index: 0, kind: input, shape index: {}]
  %s1 = inlined_call_operand.vmem [shape: f32[2,16,3], index: 1, kind: input, shape index: {}]
  %s2 = inlined_call_operand.vmem [shape: f32[16,3], index: 2, kind: input, shape index: {}]
  %s3 = inlined_call_operand.vmem [shape: f32[16,1], index: 3, kind: input, shape index: {}]
  %s4 = inlined_call_operand.vmem [shape: f32[32,16], index: 4, kind: input, shape index: {}]
  %s5 = inlined_call_operand.vmem [shape: f32[32,1], index: 5, kind: input, shape index: {}]
  %s6 = inlined_call_operand.vmem [shape: f32[64,32], index: 6, kind: input, shape index: {}]
  %s7 = inlined_call_operand.vmem [shape: f32[2,64,1], index: 7, kind: input, shape index: {}]
  %s8 = inlined_call_operand.vmem [shape: f32[2,64,1], index: 8, kind: output, shape index: {}]
  %s9 = sld [smem:[#allocation0]]
  $region77: #{pointnet_feat_forward.3} parent=0
    _
  %s11 = ssub.s32 1, %s9
  %s12 = scalar_select 0, %s11, %s9
  loop: start=0, step=1, limit=4
  $region2: #{pointnet_feat_forward.3} parent=0 // loop_pre_header
    _
  $region3: #{pointnet_feat_forward.3} parent=0 // loop_header
    %s14 = sphi 0, %s18
    %p15 = scmp.ge.s32.totalorder %s14, 4
    %s21 = sphi 0, %s33
    %s22 = sphi 0, %s29
    %s23 = sphi 0, %s21
    %s24 = sphi 0, %s22
    %s25 = sphi 0, %s23
    %s26 = sphi 0, %s24
    %s38 = sphi 0, %s40
    %s41 = sphi 0, %s38
    %s42 = sphi 0, %s41
    %s58 = sphi 0, %s42
    %s64 = sphi 0, %s66
    %s67 = sphi 0, %s64
    %s68 = sphi 0, %s67
    %s84 = sphi 0, %s68
    %s88 = sphi 0, %s88
    %s90 = sphi 0, %s88
    %s91 = sphi 0, %s90
    %s105 = sphi 0, %s91
    %s109 = sphi 0, %s109
    %s111 = sphi 0, %s109
    %s112 = sphi 0, %s111
    %s126 = sphi 0, %s112
    %s130 = sphi 0, %s130
    %s132 = sphi 0, %s130
    %s133 = sphi 0, %s132
    %s147 = sphi 0, %s133
    %s151 = sphi 0, %s151
    %s153 = sphi 0, %s151
    %s154 = sphi 0, %s153
    %s168 = sphi 0, %s154
    %s172 = sphi 0, %s172
    %s174 = sphi 0, %s172
    %s175 = sphi 0, %s174
    %s189 = sphi 0, %s175
    %s195 = sphi 0, %s197
    %s198 = sphi 0, %s195
    %s199 = sphi 0, %s198
    %s215 = sphi 0, %s199
    %s221 = sphi 0, %s223
    %s224 = sphi 0, %s221
    %s225 = sphi 0, %s224
    %s241 = sphi 0, %s225
  $region4: #{pointnet_feat_forward.3} parent=0 // loop_header_branch
    %17 = sbr.rel (%p15) target = $region8
  $region5: #{pointnet_feat_forward.3} parent=0 // loop_body
    %s19 = ssub.s32 %s14, 1
    %s20 = ssub.s32 %s14, 2
    %s27 = sadd.s32 1, %s22
    %p28 = scmp.ge.s32.totalorder %s27, 1
    %s29 = scalar_select %p28, 0, %s27
    %s30 = sadd.s32 1, %s21
    %s31 = scalar_select %p28, %s30, %s21
    %p32 = scmp.ge.s32.totalorder %s31, 2
    %s33 = scalar_select %p32, 0, %s31
    %s34 = ssub.s32 %s21, %s33
    %s35 = ssub.s32 %s22, %s29
    %s36 = sor.u32 %s34, %s35
    %p37 = scmp.eq.s32.totalorder %s36, 0
    %s39 = sadd.s32 %s38, 1
    %s40 = scalar_select %p37, %s38, %s39
    %p43 = pneg %p37
    %p44 = scmp.eq.s32.totalorder %s14, 1
    %p45 = por %p43, %p44
    %p46 = scmp.ne.s32.totalorder %s38, %s41
    %p47 = scmp.eq.s32.totalorder %s14, 0
    %p48 = por %p46, %p47
    %p49 = scmp.ne.s32.totalorder %s38, %s41
    %p50 = scmp.eq.s32.totalorder %s19, 1
    %p51 = por %p49, %p50
    %p52 = scmp.ne.s32.totalorder %s41, %s42
    %p53 = scmp.eq.s32.totalorder %s19, 0
    %p54 = por %p52, %p53
    %p55 = scmp.ne.s32.totalorder %s41, %s42
    %p56 = scmp.eq.s32.totalorder %s20, 1
    %p57 = por %p55, %p56
    %p59 = scmp.ne.s32.totalorder %s42, %s58
    %p60 = scmp.eq.s32.totalorder %s20, 0
    %p61 = por %p59, %p60
    %s62 = ssub.s32 %s21, %s33
    %p63 = scmp.eq.s32.totalorder %s62, 0
    %s65 = sadd.s32 %s64, 1
    %s66 = scalar_select %p63, %s64, %s65
    %p69 = pneg %p63
    %p70 = scmp.eq.s32.totalorder %s14, 1
    %p71 = por %p69, %p70
    %p72 = scmp.ne.s32.totalorder %s64, %s67
    %p73 = scmp.eq.s32.totalorder %s14, 0
    %p74 = por %p72, %p73
    %p75 = scmp.ne.s32.totalorder %s64, %s67
    %p76 = scmp.eq.s32.totalorder %s19, 1
    %p77 = por %p75, %p76
    %p78 = scmp.ne.s32.totalorder %s67, %s68
    %p79 = scmp.eq.s32.totalorder %s19, 0
    %p80 = por %p78, %p79
    %p81 = scmp.ne.s32.totalorder %s67, %s68
    %p82 = scmp.eq.s32.totalorder %s20, 1
    %p83 = por %p81, %p82
    %p85 = scmp.ne.s32.totalorder %s68, %s84
    %p86 = scmp.eq.s32.totalorder %s20, 0
    %p87 = por %p85, %p86
    %s89 = sadd.s32 %s88, 1
    %p92 = scmp.eq.s32.totalorder %s14, 1
    %p93 = scmp.ne.s32.totalorder %s88, %s90
    %p94 = scmp.eq.s32.totalorder %s14, 0
    %p95 = por %p93, %p94
    %p96 = scmp.ne.s32.totalorder %s88, %s90
    %p97 = scmp.eq.s32.totalorder %s19, 1
    %p98 = por %p96, %p97
    %p99 = scmp.ne.s32.totalorder %s90, %s91
    %p100 = scmp.eq.s32.totalorder %s19, 0
    %p101 = por %p99, %p100
    %p102 = scmp.ne.s32.totalorder %s90, %s91
    %p103 = scmp.eq.s32.totalorder %s20, 1
    %p104 = por %p102, %p103
    %p106 = scmp.ne.s32.totalorder %s91, %s105
    %p107 = scmp.eq.s32.totalorder %s20, 0
    %p108 = por %p106, %p107
    %s110 = sadd.s32 %s109, 1
    %p113 = scmp.eq.s32.totalorder %s14, 1
    %p114 = scmp.ne.s32.totalorder %s109, %s111
    %p115 = scmp.eq.s32.totalorder %s14, 0
    %p116 = por %p114, %p115
    %p117 = scmp.ne.s32.totalorder %s109, %s111
    %p118 = scmp.eq.s32.totalorder %s19, 1
    %p119 = por %p117, %p118
    %p120 = scmp.ne.s32.totalorder %s111, %s112
    %p121 = scmp.eq.s32.totalorder %s19, 0
    %p122 = por %p120, %p121
    %p123 = scmp.ne.s32.totalorder %s111, %s112
    %p124 = scmp.eq.s32.totalorder %s20, 1
    %p125 = por %p123, %p124
    %p127 = scmp.ne.s32.totalorder %s112, %s126
    %p128 = scmp.eq.s32.totalorder %s20, 0
    %p129 = por %p127, %p128
    %s131 = sadd.s32 %s130, 1
    %p134 = scmp.eq.s32.totalorder %s14, 1
    %p135 = scmp.ne.s32.totalorder %s130, %s132
    %p136 = scmp.eq.s32.totalorder %s14, 0
    %p137 = por %p135, %p136
    %p138 = scmp.ne.s32.totalorder %s130, %s132
    %p139 = scmp.eq.s32.totalorder %s19, 1
    %p140 = por %p138, %p139
    %p141 = scmp.ne.s32.totalorder %s132, %s133
    %p142 = scmp.eq.s32.totalorder %s19, 0
    %p143 = por %p141, %p142
    %p144 = scmp.ne.s32.totalorder %s132, %s133
    %p145 = scmp.eq.s32.totalorder %s20, 1
    %p146 = por %p144, %p145
    %p148 = scmp.ne.s32.totalorder %s133, %s147
    %p149 = scmp.eq.s32.totalorder %s20, 0
    %p150 = por %p148, %p149
    %s152 = sadd.s32 %s151, 1
    %p155 = scmp.eq.s32.totalorder %s14, 1
    %p156 = scmp.ne.s32.totalorder %s151, %s153
    %p157 = scmp.eq.s32.totalorder %s14, 0
    %p158 = por %p156, %p157
    %p159 = scmp.ne.s32.totalorder %s151, %s153
    %p160 = scmp.eq.s32.totalorder %s19, 1
    %p161 = por %p159, %p160
    %p162 = scmp.ne.s32.totalorder %s153, %s154
    %p163 = scmp.eq.s32.totalorder %s19, 0
    %p164 = por %p162, %p163
    %p165 = scmp.ne.s32.totalorder %s153, %s154
    %p166 = scmp.eq.s32.totalorder %s20, 1
    %p167 = por %p165, %p166
    %p169 = scmp.ne.s32.totalorder %s154, %s168
    %p170 = scmp.eq.s32.totalorder %s20, 0
    %p171 = por %p169, %p170
    %s173 = sadd.s32 %s172, 1
    %p176 = scmp.eq.s32.totalorder %s14, 1
    %p177 = scmp.ne.s32.totalorder %s172, %s174
    %p178 = scmp.eq.s32.totalorder %s14, 0
    %p179 = por %p177, %p178
    %p180 = scmp.ne.s32.totalorder %s172, %s174
    %p181 = scmp.eq.s32.totalorder %s19, 1
    %p182 = por %p180, %p181
    %p183 = scmp.ne.s32.totalorder %s174, %s175
    %p184 = scmp.eq.s32.totalorder %s19, 0
    %p185 = por %p183, %p184
    %p186 = scmp.ne.s32.totalorder %s174, %s175
    %p187 = scmp.eq.s32.totalorder %s20, 1
    %p188 = por %p186, %p187
    %p190 = scmp.ne.s32.totalorder %s175, %s189
    %p191 = scmp.eq.s32.totalorder %s20, 0
    %p192 = por %p190, %p191
    %s193 = ssub.s32 %s21, %s33
    %p194 = scmp.eq.s32.totalorder %s193, 0
    %s196 = sadd.s32 %s195, 1
    %s197 = scalar_select %p194, %s195, %s196
    %p200 = pneg %p194
    %p201 = scmp.eq.s32.totalorder %s14, 1
    %p202 = por %p200, %p201
    %p203 = scmp.ne.s32.totalorder %s195, %s198
    %p204 = scmp.eq.s32.totalorder %s14, 0
    %p205 = por %p203, %p204
    %p206 = scmp.ne.s32.totalorder %s195, %s198
    %p207 = scmp.eq.s32.totalorder %s19, 1
    %p208 = por %p206, %p207
    %p209 = scmp.ne.s32.totalorder %s198, %s199
    %p210 = scmp.eq.s32.totalorder %s19, 0
    %p211 = por %p209, %p210
    %p212 = scmp.ne.s32.totalorder %s198, %s199
    %p213 = scmp.eq.s32.totalorder %s20, 1
    %p214 = por %p212, %p213
    %p216 = scmp.ne.s32.totalorder %s199, %s215
    %p217 = scmp.eq.s32.totalorder %s20, 0
    %p218 = por %p216, %p217
    %s219 = ssub.s32 %s21, %s33
    %p220 = scmp.eq.s32.totalorder %s219, 0
    %s222 = sadd.s32 %s221, 1
    %s223 = scalar_select %p220, %s221, %s222
    %p226 = pneg %p220
    %p227 = scmp.eq.s32.totalorder %s14, 1
    %p228 = por %p226, %p227
    %p229 = scmp.ne.s32.totalorder %s221, %s224
    %p230 = scmp.eq.s32.totalorder %s14, 0
    %p231 = por %p229, %p230
    %p232 = scmp.ne.s32.totalorder %s221, %s224
    %p233 = scmp.eq.s32.totalorder %s19, 1
    %p234 = por %p232, %p233
    %p235 = scmp.ne.s32.totalorder %s224, %s225
    %p236 = scmp.eq.s32.totalorder %s19, 0
    %p237 = por %p235, %p236
    %p238 = scmp.ne.s32.totalorder %s224, %s225
    %p239 = scmp.eq.s32.totalorder %s20, 1
    %p240 = por %p238, %p239
    %p242 = scmp.ne.s32.totalorder %s225, %s241
    %p243 = scmp.eq.s32.totalorder %s20, 0
    %p244 = por %p242, %p243
    %p245 = scmp.le.s32.totalorder 1, %s14
    %p246 = scmp.lt.s32.totalorder %s14, 3
    %p247 = pnand %p245, %p246
    %p248 = pneg %p247
    // Predicated region
    $region9: #{pointnet_feat_forward.3} parent=5 // pred_check
      _
    $region10: #{pointnet_feat_forward.3} parent=5 // pred_check_branch
      %250 = sbr.rel (%p247) target = $region12
    $region11: #{pointnet_feat_forward.3} parent=5 // pred_region
      %s251 = ssub.s32 %s14, 1
      // Predicated region
      $region13: #{pointnet_feat_forward.3} parent=11 // pred_check
        %p252 = pneg %p101
      $region14: #{pointnet_feat_forward.3} parent=11 // pred_check_branch
        %254 = sbr.rel (%p252) target = $region16
      $region15: #{pointnet_feat_forward.3} parent=11 // pred_region
        _
      $region16: #{pointnet_feat_forward.3} parent=11 // pred_fallthru
        _
      // Predicated region
      $region17: #{pointnet_feat_forward.3} parent=11 // pred_check
        %p255 = pneg %p122
      $region18: #{pointnet_feat_forward.3} parent=11 // pred_check_branch
        %257 = sbr.rel (%p255) target = $region20
      $region19: #{pointnet_feat_forward.3} parent=11 // pred_region
        _
      $region20: #{pointnet_feat_forward.3} parent=11 // pred_fallthru
        _
      // Predicated region
      $region21: #{pointnet_feat_forward.3} parent=11 // pred_check
        %p258 = pneg %p143
      $region22: #{pointnet_feat_forward.3} parent=11 // pred_check_branch
        %260 = sbr.rel (%p258) target = $region24
      $region23: #{pointnet_feat_forward.3} parent=11 // pred_region
        _
      $region24: #{pointnet_feat_forward.3} parent=11 // pred_fallthru
        _
      // Predicated region
      $region25: #{pointnet_feat_forward.3} parent=11 // pred_check
        %p261 = pneg %p164
      $region26: #{pointnet_feat_forward.3} parent=11 // pred_check_branch
        %263 = sbr.rel (%p261) target = $region28
      $region27: #{pointnet_feat_forward.3} parent=11 // pred_region
        _
      $region28: #{pointnet_feat_forward.3} parent=11 // pred_fallthru
        _
      // Predicated region
      $region29: #{pointnet_feat_forward.3} parent=11 // pred_check
        %p264 = pneg %p185
      $region30: #{pointnet_feat_forward.3} parent=11 // pred_check_branch
        %266 = sbr.rel (%p264) target = $region32
      $region31: #{pointnet_feat_forward.3} parent=11 // pred_region
        _
      $region32: #{pointnet_feat_forward.3} parent=11 // pred_fallthru
        _
    $region12: #{pointnet_feat_forward.3} parent=5 // pred_fallthru
      _
    %p267 = scmp.lt.s32.totalorder %s14, 2
    // Predicated region
    $region33: #{pointnet_feat_forward.3} parent=5 // pred_check
      %p268 = pneg %p267
    $region34: #{pointnet_feat_forward.3} parent=5 // pred_check_branch
      %270 = sbr.rel (%p268) target = $region36
    $region35: #{pointnet_feat_forward.3} parent=5 // pred_region
      // Predicated region
      $region37: #{pointnet_feat_forward.3} parent=35 // pred_check
        %p271 = pneg %p48
      $region38: #{pointnet_feat_forward.3} parent=35 // pred_check_branch
        %273 = sbr.rel (%p271) target = $region40
      $region39: #{pointnet_feat_forward.3} parent=35 // pred_region
        %s274 = smul.u32 3, %s22
        %p275 = scmp.lt.s32.totalorder %s21, 1
        %s276 = scalar_select %p275, %s21, 1
        %p277 = scmp.lt.s32.totalorder %s274, 2
        %s278 = scalar_select %p277, %s274, 2
        %s279 = smul.addr %s276, 3
        %s280 = sadd.s32 %s278, %s279
        %s281 = smul.addr %s280, 8
        %s282 = scalar_lea.vmem %s0, %s281
        %s283 = smul.u32 3, %s22
      $region40: #{pointnet_feat_forward.3} parent=35 // pred_fallthru
        _
      // Predicated region
      $region41: #{pointnet_feat_forward.3} parent=35 // pred_check
        %p284 = pneg %p74
      $region42: #{pointnet_feat_forward.3} parent=35 // pred_check_branch
        %286 = sbr.rel (%p284) target = $region44
      $region43: #{pointnet_feat_forward.3} parent=35 // pred_region
        %p287 = scmp.lt.s32.totalorder %s21, 1
        %s288 = scalar_select %p287, %s21, 1
        %s289 = smul.addr %s288, 2
        %s290 = smul.addr %s289, 8
        %s291 = scalar_lea.vmem %s1, %s290
      $region44: #{pointnet_feat_forward.3} parent=35 // pred_fallthru
        _
      // Predicated region
      $region45: #{pointnet_feat_forward.3} parent=35 // pred_check
        %p292 = pneg %p205
      $region46: #{pointnet_feat_forward.3} parent=35 // pred_check_branch
        %294 = sbr.rel (%p292) target = $region48
      $region47: #{pointnet_feat_forward.3} parent=35 // pred_region
        %p295 = scmp.lt.s32.totalorder %s21, 1
        %s296 = scalar_select %p295, %s21, 1
        %s297 = smul.addr %s296, 8
        %s298 = smul.addr %s297, 8
        %s299 = scalar_lea.vmem %s7, %s298
      $region48: #{pointnet_feat_forward.3} parent=35 // pred_fallthru
        _
    $region36: #{pointnet_feat_forward.3} parent=5 // pred_fallthru
      _
    %p300 = scmp.le.s32.totalorder 1, %s14
    %p301 = scmp.lt.s32.totalorder %s14, 3
    %p302 = pnand %p300, %p301
    %p303 = pneg %p302
    // Predicated region
    $region49: #{pointnet_feat_forward.3} parent=5 // pred_check
      _
    $region50: #{pointnet_feat_forward.3} parent=5 // pred_check_branch
      %305 = sbr.rel (%p302) target = $region52
    $region51: #{pointnet_feat_forward.3} parent=5 // pred_region
      %s306 = ssub.s32 %s14, 1
      %s307 = smul.u32 3, %s24
      %p308 = scmp.lt.s32.totalorder %s23, 1
      %s309 = scalar_select %p308, %s23, 1
      %p310 = scmp.lt.s32.totalorder %s307, 2
      %s311 = scalar_select %p310, %s307, 2
      %s312 = smul.addr %s309, 3
      %s313 = sadd.s32 %s311, %s312
      %s314 = smul.addr %s313, 8
      %s315 = scalar_lea.vmem %s0, %s314
      %p316 = pneg %p54
      %p317 = pneg %p51
      %p318 = scmp.lt.s32.totalorder %s23, 1
      %s319 = scalar_select %p318, %s23, 1
      %s320 = smul.addr %s319, 2
      %s321 = smul.addr %s320, 8
      %s322 = scalar_lea.vmem %s1, %s321
      %p323 = pneg %p80
      %p324 = pneg %p77
      %p325 = pneg %p101
      %p326 = pneg %p98
      %p327 = pneg %p122
      %p328 = pneg %p119
      %p329 = pneg %p143
      %p330 = pneg %p140
      %p331 = pneg %p164
      %p332 = pneg %p161
      %p333 = pneg %p185
      %p334 = pneg %p182
      %p335 = scmp.lt.s32.totalorder %s23, 1
      %s336 = scalar_select %p335, %s23, 1
      %s337 = smul.addr %s336, 8
      %s338 = smul.addr %s337, 8
      %s339 = scalar_lea.vmem %s7, %s338
      %p340 = pneg %p211
      %p341 = pneg %p208
      %p342 = pneg %p237
      %p343 = pneg %p234
      %p344 = scmp.lt.s32.totalorder %s23, 1
      %s345 = scalar_select %p344, %s23, 1
      %s346 = smul.addr %s345, 8
      %s347 = smul.addr %s346, 8
      %s348 = scalar_lea.vmem %s8, %s347
      %s349 = smul.u32 3, %s24
      %p350 = scmp.lt.s32.totalorder %s23, 1
      %s351 = scalar_select %p350, %s23, 1
      %p352 = scmp.lt.s32.totalorder %s349, 2
      %s353 = scalar_select %p352, %s349, 2
      %s354 = smul.addr %s351, 3
      %s355 = sadd.s32 %s353, %s354
      %s356 = smul.addr %s355, 8
      %s357 = scalar_lea.vmem %s0, %s356
      %s358 = smul.u32 3, %s24
      %p359 = scmp.lt.s32.totalorder %s23, 1
      %s360 = scalar_select %p359, %s23, 1
      %s361 = smul.addr %s360, 2
      %s362 = smul.addr %s361, 8
      %s363 = scalar_lea.vmem %s1, %s362
      %p364 = scmp.lt.s32.totalorder %s23, 1
      %s365 = scalar_select %p364, %s23, 1
      %s366 = smul.addr %s365, 8
      %s367 = smul.addr %s366, 8
      %s368 = scalar_lea.vmem %s7, %s367
      %p369 = scmp.lt.s32.totalorder %s23, 1
      %s370 = scalar_select %p369, %s23, 1
      %s371 = smul.addr %s370, 8
      %s372 = smul.addr %s371, 8
      %s373 = scalar_lea.vmem %s8, %s372
      %v374 = vld [vmem:[%s357] sm:$0x7]
      %v375 = vld [vmem:[%s357 + $0x8] sm:$0x7]
      %v376 = vld [vmem:[%s357 + $0x10] sm:$0x7]
      %v377 = vld [vmem:[%s357] sm:$0x38]
      %v378 = vld [vmem:[%s357 + $0x8] sm:$0x38]
      %v379 = vld [vmem:[%s357 + $0x10] sm:$0x38]
      %v380 = vld [vmem:[%s363] sm:$0xff]
      %v381 = vld [vmem:[%s363 + $0x8] sm:$0xff]
      %v382 = vld [vmem:[%s2] sm:$0xff]
      %v383 = vld [vmem:[%s2 + $0x8] sm:$0xff]
      %v387 = vrot.slane %v377, 3
      %v388 = vrot.slane %v378, 3
      %v389 = vrot.slane %v379, 3
      %vm390 = vcmask 23552
      %v392 = vsel %vm390, %v382, 0
      %v395 = vsel %vm390, %v383, 0
      %vm397 = vcmask 1042432
      %v398 = vsel %vm397, %v387, 0
      %v400 = vsel %vm397, %v388, 0
      %v402 = vsel %vm397, %v389, 0
      %404 = vmatprep.subr.mxu0 %v400
      %405 = vmatpush1.msra.mxu0 %v398
      %406 = vmatprep.subr.mxu0 0.0
      %407 = vmatpush1.msra.mxu0 0.0
      %408 = vmatprep.subr.mxu0 0.0
      %409 = vmatpush1.msra.mxu0 0.0
      %410 = vmatprep.subr.mxu0 0.0
      %411 = vmatpush1.msra.mxu0 0.0
      %412 = vmatprep.subr.mxu0 0.0
      %413 = vmatpush1.msra.mxu0 0.0
      %414 = vmatprep.subr.mxu0 0.0
      %415 = vmatpush1.msra.mxu0 0.0
      %416 = vmatprep.subr.mxu0 0.0
      %417 = vmatpush1.msra.mxu0 0.0
      %418 = vmatprep.subr.mxu0 0.0
      %419 = vmatpush1.msra.mxu0 0.0
      %420 = vmatprep.subr.mxu0 0.0
      %421 = vmatpush1.msra.mxu0 0.0
      %422 = vmatprep.subr.mxu0 0.0
      %423 = vmatpush1.msra.mxu0 0.0
      %424 = vmatprep.subr.mxu0 0.0
      %425 = vmatpush1.msra.mxu0 0.0
      %426 = vmatprep.subr.mxu0 0.0
      %427 = vmatpush1.msra.mxu0 0.0
      %428 = vmatprep.subr.mxu0 0.0
      %429 = vmatpush1.msra.mxu0 0.0
      %430 = vmatprep.subr.mxu0 0.0
      %431 = vmatpush1.msra.mxu0 0.0
      %432 = vmatprep.subr.mxu0 0.0
      %433 = vmatpush1.msra.mxu0 0.0
      %434 = vmatprep.subr.mxu0 0.0
      %435 = vmatpush1.msra.mxu0 0.0
      %436 = vmatprep.subr.mxu0 0.0
      %437 = vmatpush1.msra.mxu0 0.0
      %438 = vmatprep.subr.mxu0 0.0
      %439 = vmatpush1.msra.mxu0 0.0
      %440 = vmatprep.subr.mxu0 0.0
      %441 = vmatpush1.msra.mxu0 0.0
      %442 = vmatprep.subr.mxu0 0.0
      %443 = vmatpush1.msra.mxu0 0.0
      %444 = vmatprep.subr.mxu0 0.0
      %445 = vmatpush1.msra.mxu0 0.0
      %446 = vmatprep.subr.mxu0 0.0
      %447 = vmatpush1.msra.mxu0 0.0
      %448 = vmatprep.subr.mxu0 0.0
      %449 = vmatpush1.msra.mxu0 0.0
      %450 = vmatprep.subr.mxu0 0.0
      %451 = vmatpush1.msra.mxu0 0.0
      %452 = vmatprep.subr.mxu0 0.0
      %453 = vmatpush1.msra.mxu0 0.0
      %454 = vmatprep.subr.mxu0 0.0
      %455 = vmatpush1.msra.mxu0 0.0
      %456 = vmatprep.subr.mxu0 0.0
      %457 = vmatpush1.msra.mxu0 0.0
      %458 = vmatprep.subr.mxu0 0.0
      %459 = vmatpush1.msra.mxu0 0.0
      %460 = vmatprep.subr.mxu0 0.0
      %461 = vmatpush1.msra.mxu0 0.0
      %462 = vmatprep.subr.mxu0 0.0
      %463 = vmatpush1.msra.mxu0 0.0
      %464 = vmatprep.subr.mxu0 0.0
      %465 = vmatpush1.msra.mxu0 0.0
      %466 = vmatprep.subr.mxu0 0.0
      %467 = vmatpush1.msra.mxu0 0.0
      %468 = vmatprep.mubr.f32.mxu0 0.0
      %469 = vmatmul.mubr.f32.gmra.mrb[0].mxu0 %v392
      %v470 = vpop.f32.mrb[0].mxu0
      %v471 = vadd.f32 0.0, %v470
      %v472 = vpop.f32.mrb[0].mxu0
      %v473 = vadd.f32 0.0, %v472
      %474 = vmatprep.mubr.f32.mxu0 0.0
      %475 = vmatmul.mubr.f32.gmra.mrb[0].mxu0 %v395
      %v476 = vpop.f32.mrb[0].mxu0
      %v477 = vadd.f32 0.0, %v476
      %v478 = vpop.f32.mrb[0].mxu0
      %v479 = vadd.f32 0.0, %v478
      %480 = vdwg.mxu0
      %481 = vmatprep.subr.mxu0 0.0
      %482 = vmatpush1.msra.mxu0 %v402
      %483 = vmatprep.subr.mxu0 0.0
      %484 = vmatpush1.msra.mxu0 0.0
      %485 = vmatprep.subr.mxu0 0.0
      %486 = vmatpush1.msra.mxu0 0.0
      %487 = vmatprep.subr.mxu0 0.0
      %488 = vmatpush1.msra.mxu0 0.0
      %489 = vmatprep.subr.mxu0 0.0
      %490 = vmatpush1.msra.mxu0 0.0
      %491 = vmatprep.subr.mxu0 0.0
      %492 = vmatpush1.msra.mxu0 0.0
      %493 = vmatprep.subr.mxu0 0.0
      %494 = vmatpush1.msra.mxu0 0.0
      %495 = vmatprep.subr.mxu0 0.0
      %496 = vmatpush1.msra.mxu0 0.0
      %497 = vmatprep.subr.mxu0 0.0
      %498 = vmatpush1.msra.mxu0 0.0
      %499 = vmatprep.subr.mxu0 0.0
      %500 = vmatpush1.msra.mxu0 0.0
      %501 = vmatprep.subr.mxu0 0.0
      %502 = vmatpush1.msra.mxu0 0.0
      %503 = vmatprep.subr.mxu0 0.0
      %504 = vmatpush1.msra.mxu0 0.0
      %505 = vmatprep.subr.mxu0 0.0
      %506 = vmatpush1.msra.mxu0 0.0
      %507 = vmatprep.subr.mxu0 0.0
      %508 = vmatpush1.msra.mxu0 0.0
      %509 = vmatprep.subr.mxu0 0.0
      %510 = vmatpush1.msra.mxu0 0.0
      %511 = vmatprep.subr.mxu0 0.0
      %512 = vmatpush1.msra.mxu0 0.0
      %513 = vmatprep.subr.mxu0 0.0
      %514 = vmatpush1.msra.mxu0 0.0
      %515 = vmatprep.subr.mxu0 0.0
      %516 = vmatpush1.msra.mxu0 0.0
      %517 = vmatprep.subr.mxu0 0.0
      %518 = vmatpush1.msra.mxu0 0.0
      %519 = vmatprep.subr.mxu0 0.0
      %520 = vmatpush1.msra.mxu0 0.0
      %521 = vmatprep.subr.mxu0 0.0
      %522 = vmatpush1.msra.mxu0 0.0
      %523 = vmatprep.subr.mxu0 0.0
      %524 = vmatpush1.msra.mxu0 0.0
      %525 = vmatprep.subr.mxu0 0.0
      %526 = vmatpush1.msra.mxu0 0.0
      %527 = vmatprep.subr.mxu0 0.0
      %528 = vmatpush1.msra.mxu0 0.0
      %529 = vmatprep.subr.mxu0 0.0
      %530 = vmatpush1.msra.mxu0 0.0
      %531 = vmatprep.subr.mxu0 0.0
      %532 = vmatpush1.msra.mxu0 0.0
      %533 = vmatprep.subr.mxu0 0.0
      %534 = vmatpush1.msra.mxu0 0.0
      %535 = vmatprep.subr.mxu0 0.0
      %536 = vmatpush1.msra.mxu0 0.0
      %537 = vmatprep.subr.mxu0 0.0
      %538 = vmatpush1.msra.mxu0 0.0
      %539 = vmatprep.subr.mxu0 0.0
      %540 = vmatpush1.msra.mxu0 0.0
      %541 = vmatprep.subr.mxu0 0.0
      %542 = vmatpush1.msra.mxu0 0.0
      %543 = vmatprep.subr.mxu0 0.0
      %544 = vmatpush1.msra.mxu0 0.0
      %545 = vmatprep.mubr.f32.mxu0 0.0
      %546 = vmatmul.mubr.f32.gmra.mrb[0].mxu0 %v392
      %v547 = vpop.f32.mrb[0].mxu0
      %v548 = vadd.f32 0.0, %v547
      %v549 = vpop.f32.mrb[0].mxu0
      %550 = vmatprep.mubr.f32.mxu0 0.0
      %551 = vmatmul.mubr.f32.gmra.mrb[0].mxu0 %v395
      %v552 = vpop.f32.mrb[0].mxu0
      %v553 = vadd.f32 0.0, %v552
      %v554 = vpop.f32.mrb[0].mxu0
      %555 = vdwg.mxu0
      %v557 = vsel %vm390, %v380, 0
      %v560 = vsel %vm390, %v381, 0
      %v563 = vsel %vm397, %v374, 0
      %v566 = vsel %vm397, %v375, 0
      %v569 = vsel %vm397, %v376, 0
      %571 = vmatprep.subr.mxu0 %v566
      %572 = vmatpush1.msra.mxu0 %v563
      %573 = vmatprep.subr.mxu0 0.0
      %574 = vmatpush1.msra.mxu0 0.0
      %575 = vmatprep.subr.mxu0 0.0
      %576 = vmatpush1.msra.mxu0 0.0
      %577 = vmatprep.subr.mxu0 0.0
      %578 = vmatpush1.msra.mxu0 0.0
      %579 = vmatprep.subr.mxu0 0.0
      %580 = vmatpush1.msra.mxu0 0.0
      %581 = vmatprep.subr.mxu0 0.0
      %582 = vmatpush1.msra.mxu0 0.0
      %583 = vmatprep.subr.mxu0 0.0
      %584 = vmatpush1.msra.mxu0 0.0
      %585 = vmatprep.subr.mxu0 0.0
      %586 = vmatpush1.msra.mxu0 0.0
      %587 = vmatprep.subr.mxu0 0.0
      %588 = vmatpush1.msra.mxu0 0.0
      %589 = vmatprep.subr.mxu0 0.0
      %590 = vmatpush1.msra.mxu0 0.0
      %591 = vmatprep.subr.mxu0 0.0
      %592 = vmatpush1.msra.mxu0 0.0
      %593 = vmatprep.subr.mxu0 0.0
      %594 = vmatpush1.msra.mxu0 0.0
      %595 = vmatprep.subr.mxu0 0.0
      %596 = vmatpush1.msra.mxu0 0.0
      %597 = vmatprep.subr.mxu0 0.0
      %598 = vmatpush1.msra.mxu0 0.0
      %599 = vmatprep.subr.mxu0 0.0
      %600 = vmatpush1.msra.mxu0 0.0
      %601 = vmatprep.subr.mxu0 0.0
      %602 = vmatpush1.msra.mxu0 0.0
      %603 = vmatprep.subr.mxu0 0.0
      %604 = vmatpush1.msra.mxu0 0.0
      %605 = vmatprep.subr.mxu0 0.0
      %606 = vmatpush1.msra.mxu0 0.0
      %607 = vmatprep.subr.mxu0 0.0
      %608 = vmatpush1.msra.mxu0 0.0
      %609 = vmatprep.subr.mxu0 0.0
      %610 = vmatpush1.msra.mxu0 0.0
      %611 = vmatprep.subr.mxu0 0.0
      %612 = vmatpush1.msra.mxu0 0.0
      %613 = vmatprep.subr.mxu0 0.0
      %614 = vmatpush1.msra.mxu0 0.0
      %615 = vmatprep.subr.mxu0 0.0
      %616 = vmatpush1.msra.mxu0 0.0
      %617 = vmatprep.subr.mxu0 0.0
      %618 = vmatpush1.msra.mxu0 0.0
      %619 = vmatprep.subr.mxu0 0.0
      %620 = vmatpush1.msra.mxu0 0.0
      %621 = vmatprep.subr.mxu0 0.0
      %622 = vmatpush1.msra.mxu0 0.0
      %623 = vmatprep.subr.mxu0 0.0
      %624 = vmatpush1.msra.mxu0 0.0
      %625 = vmatprep.subr.mxu0 0.0
      %626 = vmatpush1.msra.mxu0 0.0
      %627 = vmatprep.subr.mxu0 0.0
      %628 = vmatpush1.msra.mxu0 0.0
      %629 = vmatprep.subr.mxu0 0.0
      %630 = vmatpush1.msra.mxu0 0.0
      %631 = vmatprep.subr.mxu0 0.0
      %632 = vmatpush1.msra.mxu0 0.0
      %633 = vmatprep.subr.mxu0 0.0
      %634 = vmatpush1.msra.mxu0 0.0
      %635 = vmatprep.mubr.f32.mxu0 0.0
      %636 = vmatmul.mubr.f32.gmra.mrb[0].mxu0 %v557
      %v637 = vpop.f32.mrb[0].mxu0
      %v638 = vadd.f32 %v471, %v637
      %v639 = vpop.f32.mrb[0].mxu0
      %v640 = vadd.f32 %v473, %v639
      %641 = vmatprep.mubr.f32.mxu0 0.0
      %642 = vmatmul.mubr.f32.gmra.mrb[0].mxu0 %v560
      %v643 = vpop.f32.mrb[0].mxu0
      %v644 = vadd.f32 %v477, %v643
      %v645 = vpop.f32.mrb[0].mxu0
      %v646 = vadd.f32 %v479, %v645
      %647 = vdwg.mxu0
      %648 = vmatprep.subr.mxu0 0.0
      %649 = vmatpush1.msra.mxu0 %v569
      %650 = vmatprep.subr.mxu0 0.0
      %651 = vmatpush1.msra.mxu0 0.0
      %652 = vmatprep.subr.mxu0 0.0
      %653 = vmatpush1.msra.mxu0 0.0
      %654 = vmatprep.subr.mxu0 0.0
      %655 = vmatpush1.msra.mxu0 0.0
      %656 = vmatprep.subr.mxu0 0.0
      %657 = vmatpush1.msra.mxu0 0.0
      %658 = vmatprep.subr.mxu0 0.0
      %659 = vmatpush1.msra.mxu0 0.0
      %660 = vmatprep.subr.mxu0 0.0
      %661 = vmatpush1.msra.mxu0 0.0
      %662 = vmatprep.subr.mxu0 0.0
      %663 = vmatpush1.msra.mxu0 0.0
      %664 = vmatprep.subr.mxu0 0.0
      %665 = vmatpush1.msra.mxu0 0.0
      %666 = vmatprep.subr.mxu0 0.0
      %667 = vmatpush1.msra.mxu0 0.0
      %668 = vmatprep.subr.mxu0 0.0
      %669 = vmatpush1.msra.mxu0 0.0
      %670 = vmatprep.subr.mxu0 0.0
      %671 = vmatpush1.msra.mxu0 0.0
      %672 = vmatprep.subr.mxu0 0.0
      %673 = vmatpush1.msra.mxu0 0.0
      %674 = vmatprep.subr.mxu0 0.0
      %675 = vmatpush1.msra.mxu0 0.0
      %676 = vmatprep.subr.mxu0 0.0
      %677 = vmatpush1.msra.mxu0 0.0
      %678 = vmatprep.subr.mxu0 0.0
      %679 = vmatpush1.msra.mxu0 0.0
      %680 = vmatprep.subr.mxu0 0.0
      %681 = vmatpush1.msra.mxu0 0.0
      %682 = vmatprep.subr.mxu0 0.0
      %683 = vmatpush1.msra.mxu0 0.0
      %684 = vmatprep.subr.mxu0 0.0
      %685 = vmatpush1.msra.mxu0 0.0
      %686 = vmatprep.subr.mxu0 0.0
      %687 = vmatpush1.msra.mxu0 0.0
      %688 = vmatprep.subr.mxu0 0.0
      %689 = vmatpush1.msra.mxu0 0.0
      %690 = vmatprep.subr.mxu0 0.0
      %691 = vmatpush1.msra.mxu0 0.0
      %692 = vmatprep.subr.mxu0 0.0
      %693 = vmatpush1.msra.mxu0 0.0
      %694 = vmatprep.subr.mxu0 0.0
      %695 = vmatpush1.msra.mxu0 0.0
      %696 = vmatprep.subr.mxu0 0.0
      %697 = vmatpush1.msra.mxu0 0.0
      %698 = vmatprep.subr.mxu0 0.0
      %699 = vmatpush1.msra.mxu0 0.0
      %700 = vmatprep.subr.mxu0 0.0
      %701 = vmatpush1.msra.mxu0 0.0
      %702 = vmatprep.subr.mxu0 0.0
      %703 = vmatpush1.msra.mxu0 0.0
      %704 = vmatprep.subr.mxu0 0.0
      %705 = vmatpush1.msra.mxu0 0.0
      %706 = vmatprep.subr.mxu0 0.0
      %707 = vmatpush1.msra.mxu0 0.0
      %708 = vmatprep.subr.mxu0 0.0
      %709 = vmatpush1.msra.mxu0 0.0
      %710 = vmatprep.subr.mxu0 0.0
      %711 = vmatpush1.msra.mxu0 0.0
      %712 = vmatprep.mubr.f32.mxu0 0.0
      %713 = vmatmul.mubr.f32.gmra.mrb[0].mxu0 %v557
      %v714 = vpop.f32.mrb[0].mxu0
      %v715 = vadd.f32 %v548, %v714
      %v716 = vpop.f32.mrb[0].mxu0
      %717 = vmatprep.mubr.f32.mxu0 0.0
      %718 = vmatmul.mubr.f32.gmra.mrb[0].mxu0 %v560
      %v719 = vpop.f32.mrb[0].mxu0
      %v720 = vadd.f32 %v553, %v719
      %v721 = vpop.f32.mrb[0].mxu0
      %722 = vdwg.mxu0
      %v723 = vld [vmem:[%s3] sm:$0xff]
      %v724 = vld [vmem:[%s3 + $0x8] sm:$0xff]
      %726 = vset.pattern.permute.xlu0 0
      %727 = vperm.xlu0 %726, %v723
      %v728 = vpop.permute.xlu0 %727
      %731 = vset.pattern.permute.xlu0 0
      %732 = vperm.xlu0 %731, %v724
      %v733 = vpop.permute.xlu0 %732
      %v735 = vadd.f32 %v638, %v728
      %v736 = vadd.f32 %v640, %v728
      %v737 = vadd.f32 %v715, %v728
      %v738 = vadd.f32 %v644, %v733
      %v739 = vadd.f32 %v646, %v733
      %v740 = vadd.f32 %v720, %v733
      %v741 = vmax.f32 %v735, 0.0
      %v742 = vmax.f32 %v736, 0.0
      %v743 = vmax.f32 %v737, 0.0
      %v744 = vmax.f32 %v738, 0.0
      %v745 = vmax.f32 %v739, 0.0
      %v746 = vmax.f32 %v740, 0.0
      %v747 = vld [vmem:[%s4] sm:$0xff]
      %v748 = vld [vmem:[%s4 + $0x8] sm:$0xff]
      %v749 = vld [vmem:[%s4 + $0x10] sm:$0xff]
      %v750 = vld [vmem:[%s4 + $0x18] sm:$0xff]
      %v751 = vld [vmem:[%s5] sm:$0xff]
      %v752 = vld [vmem:[%s5 + $0x8] sm:$0xff]
      %v753 = vld [vmem:[%s5 + $0x10] sm:$0xff]
      %v754 = vld [vmem:[%s5 + $0x18] sm:$0xff]
      %756 = vset.pattern.permute.xlu0 0
      %757 = vperm.xlu0 %756, %v751
      %v758 = vpop.permute.xlu0 %757
      %761 = vset.pattern.permute.xlu0 0
      %762 = vperm.xlu0 %761, %v752
      %v763 = vpop.permute.xlu0 %762
      %766 = vset.pattern.permute.xlu0 0
      %767 = vperm.xlu0 %766, %v753
      %v768 = vpop.permute.xlu0 %767
      %771 = vset.pattern.permute.xlu0 0
      %772 = vperm.xlu0 %771, %v754
      %v773 = vpop.permute.xlu0 %772
      %vm775 = vcmask 130048
      %v777 = vsel %vm775, %v747, 0
      %v780 = vsel %vm775, %v748, 0
      %v783 = vsel %vm775, %v749, 0
      %v786 = vsel %vm775, %v750, 0
      %788 = vmatprep.subr.mxu0 %v742
      %789 = vmatpush1.msra.mxu0 %v741
      %790 = vmatprep.subr.mxu0 %v745
      %791 = vmatpush1.msra.mxu0 %v744
      %792 = vmatprep.subr.mxu0 0.0
      %793 = vmatpush1.msra.mxu0 0.0
      %794 = vmatprep.subr.mxu0 0.0
      %795 = vmatpush1.msra.mxu0 0.0
      %796 = vmatprep.subr.mxu0 0.0
      %797 = vmatpush1.msra.mxu0 0.0
      %798 = vmatprep.subr.mxu0 0.0
      %799 = vmatpush1.msra.mxu0 0.0
      %800 = vmatprep.subr.mxu0 0.0
      %801 = vmatpush1.msra.mxu0 0.0
      %802 = vmatprep.subr.mxu0 0.0
      %803 = vmatpush1.msra.mxu0 0.0
      %804 = vmatprep.subr.mxu0 0.0
      %805 = vmatpush1.msra.mxu0 0.0
      %806 = vmatprep.subr.mxu0 0.0
      %807 = vmatpush1.msra.mxu0 0.0
      %808 = vmatprep.subr.mxu0 0.0
      %809 = vmatpush1.msra.mxu0 0.0
      %810 = vmatprep.subr.mxu0 0.0
      %811 = vmatpush1.msra.mxu0 0.0
      %812 = vmatprep.subr.mxu0 0.0
      %813 = vmatpush1.msra.mxu0 0.0
      %814 = vmatprep.subr.mxu0 0.0
      %815 = vmatpush1.msra.mxu0 0.0
      %816 = vmatprep.subr.mxu0 0.0
      %817 = vmatpush1.msra.mxu0 0.0
      %818 = vmatprep.subr.mxu0 0.0
      %819 = vmatpush1.msra.mxu0 0.0
      %820 = vmatprep.subr.mxu0 0.0
      %821 = vmatpush1.msra.mxu0 0.0
      %822 = vmatprep.subr.mxu0 0.0
      %823 = vmatpush1.msra.mxu0 0.0
      %824 = vmatprep.subr.mxu0 0.0
      %825 = vmatpush1.msra.mxu0 0.0
      %826 = vmatprep.subr.mxu0 0.0
      %827 = vmatpush1.msra.mxu0 0.0
      %828 = vmatprep.subr.mxu0 0.0
      %829 = vmatpush1.msra.mxu0 0.0
      %830 = vmatprep.subr.mxu0 0.0
      %831 = vmatpush1.msra.mxu0 0.0
      %832 = vmatprep.subr.mxu0 0.0
      %833 = vmatpush1.msra.mxu0 0.0
      %834 = vmatprep.subr.mxu0 0.0
      %835 = vmatpush1.msra.mxu0 0.0
      %836 = vmatprep.subr.mxu0 0.0
      %837 = vmatpush1.msra.mxu0 0.0
      %838 = vmatprep.subr.mxu0 0.0
      %839 = vmatpush1.msra.mxu0 0.0
      %840 = vmatprep.subr.mxu0 0.0
      %841 = vmatpush1.msra.mxu0 0.0
      %842 = vmatprep.subr.mxu0 0.0
      %843 = vmatpush1.msra.mxu0 0.0
      %844 = vmatprep.subr.mxu0 0.0
      %845 = vmatpush1.msra.mxu0 0.0
      %846 = vmatprep.subr.mxu0 0.0
      %847 = vmatpush1.msra.mxu0 0.0
      %848 = vmatprep.subr.mxu0 0.0
      %849 = vmatpush1.msra.mxu0 0.0
      %850 = vmatprep.subr.mxu0 0.0
      %851 = vmatpush1.msra.mxu0 0.0
      %852 = vmatprep.mubr.f32.mxu0 0.0
      %853 = vmatmul.mubr.f32.gmra.mrb[0].mxu0 %v777
      %v854 = vpop.f32.mrb[0].mxu0
      %v855 = vadd.f32 %v758, %v854
      %v856 = vpop.f32.mrb[0].mxu0
      %v857 = vadd.f32 %v758, %v856
      %858 = vmatprep.mubr.f32.mxu0 0.0
      %859 = vmatmul.mubr.f32.gmra.mrb[0].mxu0 %v780
      %v860 = vpop.f32.mrb[0].mxu0
      %v861 = vadd.f32 %v763, %v860
      %v862 = vpop.f32.mrb[0].mxu0
      %v863 = vadd.f32 %v763, %v862
      %864 = vmatprep.mubr.f32.mxu0 0.0
      %865 = vmatmul.mubr.f32.gmra.mrb[0].mxu0 %v783
      %v866 = vpop.f32.mrb[0].mxu0
      %v867 = vadd.f32 %v768, %v866
      %v868 = vpop.f32.mrb[0].mxu0
      %v869 = vadd.f32 %v768, %v868
      %870 = vmatprep.mubr.f32.mxu0 0.0
      %871 = vmatmul.mubr.f32.gmra.mrb[0].mxu0 %v786
      %v872 = vpop.f32.mrb[0].mxu0
      %v873 = vadd.f32 %v773, %v872
      %v874 = vpop.f32.mrb[0].mxu0
      %v875 = vadd.f32 %v773, %v874
      %876 = vdwg.mxu0
      %877 = vmatprep.subr.mxu0 0.0
      %878 = vmatpush1.msra.mxu0 %v743
      %879 = vmatprep.subr.mxu0 0.0
      %880 = vmatpush1.msra.mxu0 %v746
      %881 = vmatprep.subr.mxu0 0.0
      %882 = vmatpush1.msra.mxu0 0.0
      %883 = vmatprep.subr.mxu0 0.0
      %884 = vmatpush1.msra.mxu0 0.0
      %885 = vmatprep.subr.mxu0 0.0
      %886 = vmatpush1.msra.mxu0 0.0
      %887 = vmatprep.subr.mxu0 0.0
      %888 = vmatpush1.msra.mxu0 0.0
      %889 = vmatprep.subr.mxu0 0.0
      %890 = vmatpush1.msra.mxu0 0.0
      %891 = vmatprep.subr.mxu0 0.0
      %892 = vmatpush1.msra.mxu0 0.0
      %893 = vmatprep.subr.mxu0 0.0
      %894 = vmatpush1.msra.mxu0 0.0
      %895 = vmatprep.subr.mxu0 0.0
      %896 = vmatpush1.msra.mxu0 0.0
      %897 = vmatprep.subr.mxu0 0.0
      %898 = vmatpush1.msra.mxu0 0.0
      %899 = vmatprep.subr.mxu0 0.0
      %900 = vmatpush1.msra.mxu0 0.0
      %901 = vmatprep.subr.mxu0 0.0
      %902 = vmatpush1.msra.mxu0 0.0
      %903 = vmatprep.subr.mxu0 0.0
      %904 = vmatpush1.msra.mxu0 0.0
      %905 = vmatprep.subr.mxu0 0.0
      %906 = vmatpush1.msra.mxu0 0.0
      %907 = vmatprep.subr.mxu0 0.0
      %908 = vmatpush1.msra.mxu0 0.0
      %909 = vmatprep.subr.mxu0 0.0
      %910 = vmatpush1.msra.mxu0 0.0
      %911 = vmatprep.subr.mxu0 0.0
      %912 = vmatpush1.msra.mxu0 0.0
      %913 = vmatprep.subr.mxu0 0.0
      %914 = vmatpush1.msra.mxu0 0.0
      %915 = vmatprep.subr.mxu0 0.0
      %916 = vmatpush1.msra.mxu0 0.0
      %917 = vmatprep.subr.mxu0 0.0
      %918 = vmatpush1.msra.mxu0 0.0
      %919 = vmatprep.subr.mxu0 0.0
      %920 = vmatpush1.msra.mxu0 0.0
      %921 = vmatprep.subr.mxu0 0.0
      %922 = vmatpush1.msra.mxu0 0.0
      %923 = vmatprep.subr.mxu0 0.0
      %924 = vmatpush1.msra.mxu0 0.0
      %925 = vmatprep.subr.mxu0 0.0
      %926 = vmatpush1.msra.mxu0 0.0
      %927 = vmatprep.subr.mxu0 0.0
      %928 = vmatpush1.msra.mxu0 0.0
      %929 = vmatprep.subr.mxu0 0.0
      %930 = vmatpush1.msra.mxu0 0.0
      %931 = vmatprep.subr.mxu0 0.0
      %932 = vmatpush1.msra.mxu0 0.0
      %933 = vmatprep.subr.mxu0 0.0
      %934 = vmatpush1.msra.mxu0 0.0
      %935 = vmatprep.subr.mxu0 0.0
      %936 = vmatpush1.msra.mxu0 0.0
      %937 = vmatprep.subr.mxu0 0.0
      %938 = vmatpush1.msra.mxu0 0.0
      %939 = vmatprep.subr.mxu0 0.0
      %940 = vmatpush1.msra.mxu0 0.0
      %941 = vmatprep.mubr.f32.mxu0 0.0
      %942 = vmatmul.mubr.f32.gmra.mrb[0].mxu0 %v777
      %v943 = vpop.f32.mrb[0].mxu0
      %v944 = vadd.f32 %v758, %v943
      %v945 = vpop.f32.mrb[0].mxu0
      %946 = vmatprep.mubr.f32.mxu0 0.0
      %947 = vmatmul.mubr.f32.gmra.mrb[0].mxu0 %v780
      %v948 = vpop.f32.mrb[0].mxu0
      %v949 = vadd.f32 %v763, %v948
      %v950 = vpop.f32.mrb[0].mxu0
      %951 = vmatprep.mubr.f32.mxu0 0.0
      %952 = vmatmul.mubr.f32.gmra.mrb[0].mxu0 %v783
      %v953 = vpop.f32.mrb[0].mxu0
      %v954 = vadd.f32 %v768, %v953
      %v955 = vpop.f32.mrb[0].mxu0
      %956 = vmatprep.mubr.f32.mxu0 0.0
      %957 = vmatmul.mubr.f32.gmra.mrb[0].mxu0 %v786
      %v958 = vpop.f32.mrb[0].mxu0
      %v959 = vadd.f32 %v773, %v958
      %v960 = vpop.f32.mrb[0].mxu0
      %961 = vdwg.mxu0
      %v962 = vmax.f32 %v855, 0.0
      %v963 = vmax.f32 %v857, 0.0
      %v964 = vmax.f32 %v944, 0.0
      %v965 = vmax.f32 %v861, 0.0
      %v966 = vmax.f32 %v863, 0.0
      %v967 = vmax.f32 %v949, 0.0
      %v968 = vmax.f32 %v867, 0.0
      %v969 = vmax.f32 %v869, 0.0
      %v970 = vmax.f32 %v954, 0.0
      %v971 = vmax.f32 %v873, 0.0
      %v972 = vmax.f32 %v875, 0.0
      %v973 = vmax.f32 %v959, 0.0
      %v974 = vld [vmem:[%s6] sm:$0xff]
      %v975 = vld [vmem:[%s6 + $0x8] sm:$0xff]
      %v976 = vld [vmem:[%s6 + $0x10] sm:$0xff]
      %v977 = vld [vmem:[%s6 + $0x18] sm:$0xff]
      %v978 = vld [vmem:[%s6 + $0x20] sm:$0xff]
      %v979 = vld [vmem:[%s6 + $0x28] sm:$0xff]
      %v980 = vld [vmem:[%s6 + $0x30] sm:$0xff]
      %v981 = vld [vmem:[%s6 + $0x38] sm:$0xff]
      %v982 = vld [vmem:[%s368] sm:$0xff]
      %v983 = vld [vmem:[%s368 + $0x8] sm:$0xff]
      %v984 = vld [vmem:[%s368 + $0x10] sm:$0xff]
      %v985 = vld [vmem:[%s368 + $0x18] sm:$0xff]
      %v986 = vld [vmem:[%s368 + $0x20] sm:$0xff]
      %v987 = vld [vmem:[%s368 + $0x28] sm:$0xff]
      %v988 = vld [vmem:[%s368 + $0x30] sm:$0xff]
      %v989 = vld [vmem:[%s368 + $0x38] sm:$0xff]
      %991 = vset.pattern.permute.xlu0 0
      %992 = vperm.xlu0 %991, %v982
      %v993 = vpop.permute.xlu0 %992
      %996 = vset.pattern.permute.xlu0 0
      %997 = vperm.xlu0 %996, %v983
      %v998 = vpop.permute.xlu0 %997
      %1001 = vset.pattern.permute.xlu0 0
      %1002 = vperm.xlu0 %1001, %v984
      %v1003 = vpop.permute.xlu0 %1002
      %1006 = vset.pattern.permute.xlu0 0
      %1007 = vperm.xlu0 %1006, %v985
      %v1008 = vpop.permute.xlu0 %1007
      %1011 = vset.pattern.permute.xlu0 0
      %1012 = vperm.xlu0 %1011, %v986
      %v1013 = vpop.permute.xlu0 %1012
      %1016 = vset.pattern.permute.xlu0 0
      %1017 = vperm.xlu0 %1016, %v987
      %v1018 = vpop.permute.xlu0 %1017
      %1021 = vset.pattern.permute.xlu0 0
      %1022 = vperm.xlu0 %1021, %v988
      %v1023 = vpop.permute.xlu0 %1022
      %1026 = vset.pattern.permute.xlu0 0
      %1027 = vperm.xlu0 %1026, %v989
      %v1028 = vpop.permute.xlu0 %1027
      %vm1030 = vcmask 261120
      %v1032 = vsel %vm1030, %v974, 0
      %v1035 = vsel %vm1030, %v975, 0
      %v1038 = vsel %vm1030, %v976, 0
      %v1041 = vsel %vm1030, %v977, 0
      %v1044 = vsel %vm1030, %v978, 0
      %v1047 = vsel %vm1030, %v979, 0
      %v1050 = vsel %vm1030, %v980, 0
      %v1053 = vsel %vm1030, %v981, 0
      %1055 = vmatprep.subr.mxu0 %v963
      %1056 = vmatpush1.msra.mxu0 %v962
      %1057 = vmatprep.subr.mxu0 %v966
      %1058 = vmatpush1.msra.mxu0 %v965
      %1059 = vmatprep.subr.mxu0 %v969
      %1060 = vmatpush1.msra.mxu0 %v968
      %1061 = vmatprep.subr.mxu0 %v972
      %1062 = vmatpush1.msra.mxu0 %v971
      %1063 = vmatprep.subr.mxu0 0.0
      %1064 = vmatpush1.msra.mxu0 0.0
      %1065 = vmatprep.subr.mxu0 0.0
      %1066 = vmatpush1.msra.mxu0 0.0
      %1067 = vmatprep.subr.mxu0 0.0
      %1068 = vmatpush1.msra.mxu0 0.0
      %1069 = vmatprep.subr.mxu0 0.0
      %1070 = vmatpush1.msra.mxu0 0.0
      %1071 = vmatprep.subr.mxu0 0.0
      %1072 = vmatpush1.msra.mxu0 0.0
      %1073 = vmatprep.subr.mxu0 0.0
      %1074 = vmatpush1.msra.mxu0 0.0
      %1075 = vmatprep.subr.mxu0 0.0
      %1076 = vmatpush1.msra.mxu0 0.0
      %1077 = vmatprep.subr.mxu0 0.0
      %1078 = vmatpush1.msra.mxu0 0.0
      %1079 = vmatprep.subr.mxu0 0.0
      %1080 = vmatpush1.msra.mxu0 0.0
      %1081 = vmatprep.subr.mxu0 0.0
      %1082 = vmatpush1.msra.mxu0 0.0
      %1083 = vmatprep.subr.mxu0 0.0
      %1084 = vmatpush1.msra.mxu0 0.0
      %1085 = vmatprep.subr.mxu0 0.0
      %1086 = vmatpush1.msra.mxu0 0.0
      %1087 = vmatprep.subr.mxu0 0.0
      %1088 = vmatpush1.msra.mxu0 0.0
      %1089 = vmatprep.subr.mxu0 0.0
      %1090 = vmatpush1.msra.mxu0 0.0
      %1091 = vmatprep.subr.mxu0 0.0
      %1092 = vmatpush1.msra.mxu0 0.0
      %1093 = vmatprep.subr.mxu0 0.0
      %1094 = vmatpush1.msra.mxu0 0.0
      %1095 = vmatprep.subr.mxu0 0.0
      %1096 = vmatpush1.msra.mxu0 0.0
      %1097 = vmatprep.subr.mxu0 0.0
      %1098 = vmatpush1.msra.mxu0 0.0
      %1099 = vmatprep.subr.mxu0 0.0
      %1100 = vmatpush1.msra.mxu0 0.0
      %1101 = vmatprep.subr.mxu0 0.0
      %1102 = vmatpush1.msra.mxu0 0.0
      %1103 = vmatprep.subr.mxu0 0.0
      %1104 = vmatpush1.msra.mxu0 0.0
      %1105 = vmatprep.subr.mxu0 0.0
      %1106 = vmatpush1.msra.mxu0 0.0
      %1107 = vmatprep.subr.mxu0 0.0
      %1108 = vmatpush1.msra.mxu0 0.0
      %1109 = vmatprep.subr.mxu0 0.0
      %1110 = vmatpush1.msra.mxu0 0.0
      %1111 = vmatprep.subr.mxu0 0.0
      %1112 = vmatpush1.msra.mxu0 0.0
      %1113 = vmatprep.subr.mxu0 0.0
      %1114 = vmatpush1.msra.mxu0 0.0
      %1115 = vmatprep.subr.mxu0 0.0
      %1116 = vmatpush1.msra.mxu0 0.0
      %1117 = vmatprep.subr.mxu0 0.0
      %1118 = vmatpush1.msra.mxu0 0.0
      %1119 = vmatprep.mubr.f32.mxu0 0.0
      %1120 = vmatmul.mubr.f32.gmra.mrb[0].mxu0 %v1032
      %v1121 = vpop.f32.mrb[0].mxu0
      %v1122 = vadd.f32 %v993, %v1121
      %v1123 = vpop.f32.mrb[0].mxu0
      %v1124 = vadd.f32 %v993, %v1123
      %1125 = vmatprep.mubr.f32.mxu0 0.0
      %1126 = vmatmul.mubr.f32.gmra.mrb[0].mxu0 %v1035
      %v1127 = vpop.f32.mrb[0].mxu0
      %v1128 = vadd.f32 %v998, %v1127
      %v1129 = vpop.f32.mrb[0].mxu0
      %v1130 = vadd.f32 %v998, %v1129
      %1131 = vmatprep.mubr.f32.mxu0 0.0
      %1132 = vmatmul.mubr.f32.gmra.mrb[0].mxu0 %v1038
      %v1133 = vpop.f32.mrb[0].mxu0
      %v1134 = vadd.f32 %v1003, %v1133
      %v1135 = vpop.f32.mrb[0].mxu0
      %v1136 = vadd.f32 %v1003, %v1135
      %1137 = vmatprep.mubr.f32.mxu0 0.0
      %1138 = vmatmul.mubr.f32.gmra.mrb[0].mxu0 %v1041
      %v1139 = vpop.f32.mrb[0].mxu0
      %v1140 = vadd.f32 %v1008, %v1139
      %v1141 = vpop.f32.mrb[0].mxu0
      %v1142 = vadd.f32 %v1008, %v1141
      %1143 = vmatprep.mubr.f32.mxu0 0.0
      %1144 = vmatmul.mubr.f32.gmra.mrb[0].mxu0 %v1044
      %v1145 = vpop.f32.mrb[0].mxu0
      %v1146 = vadd.f32 %v1013, %v1145
      %v1147 = vpop.f32.mrb[0].mxu0
      %v1148 = vadd.f32 %v1013, %v1147
      %1149 = vmatprep.mubr.f32.mxu0 0.0
      %1150 = vmatmul.mubr.f32.gmra.mrb[0].mxu0 %v1047
      %v1151 = vpop.f32.mrb[0].mxu0
      %v1152 = vadd.f32 %v1018, %v1151
      %v1153 = vpop.f32.mrb[0].mxu0
      %v1154 = vadd.f32 %v1018, %v1153
      %1155 = vmatprep.mubr.f32.mxu0 0.0
      %1156 = vmatmul.mubr.f32.gmra.mrb[0].mxu0 %v1050
      %v1157 = vpop.f32.mrb[0].mxu0
      %v1158 = vadd.f32 %v1023, %v1157
      %v1159 = vpop.f32.mrb[0].mxu0
      %v1160 = vadd.f32 %v1023, %v1159
      %1161 = vmatprep.mubr.f32.mxu0 0.0
      %1162 = vmatmul.mubr.f32.gmra.mrb[0].mxu0 %v1053
      %v1163 = vpop.f32.mrb[0].mxu0
      %v1164 = vadd.f32 %v1028, %v1163
      %v1165 = vpop.f32.mrb[0].mxu0
      %v1166 = vadd.f32 %v1028, %v1165
      %1167 = vdwg.mxu0
      %1168 = vmatprep.subr.mxu0 0.0
      %1169 = vmatpush1.msra.mxu0 %v964
      %1170 = vmatprep.subr.mxu0 0.0
      %1171 = vmatpush1.msra.mxu0 %v967
      %1172 = vmatprep.subr.mxu0 0.0
      %1173 = vmatpush1.msra.mxu0 %v970
      %1174 = vmatprep.subr.mxu0 0.0
      %1175 = vmatpush1.msra.mxu0 %v973
      %1176 = vmatprep.subr.mxu0 0.0
      %1177 = vmatpush1.msra.mxu0 0.0
      %1178 = vmatprep.subr.mxu0 0.0
      %1179 = vmatpush1.msra.mxu0 0.0
      %1180 = vmatprep.subr.mxu0 0.0
      %1181 = vmatpush1.msra.mxu0 0.0
      %1182 = vmatprep.subr.mxu0 0.0
      %1183 = vmatpush1.msra.mxu0 0.0
      %1184 = vmatprep.subr.mxu0 0.0
      %1185 = vmatpush1.msra.mxu0 0.0
      %1186 = vmatprep.subr.mxu0 0.0
      %1187 = vmatpush1.msra.mxu0 0.0
      %1188 = vmatprep.subr.mxu0 0.0
      %1189 = vmatpush1.msra.mxu0 0.0
      %1190 = vmatprep.subr.mxu0 0.0
      %1191 = vmatpush1.msra.mxu0 0.0
      %1192 = vmatprep.subr.mxu0 0.0
      %1193 = vmatpush1.msra.mxu0 0.0
      %1194 = vmatprep.subr.mxu0 0.0
      %1195 = vmatpush1.msra.mxu0 0.0
      %1196 = vmatprep.subr.mxu0 0.0
      %1197 = vmatpush1.msra.mxu0 0.0
      %1198 = vmatprep.subr.mxu0 0.0
      %1199 = vmatpush1.msra.mxu0 0.0
      %1200 = vmatprep.subr.mxu0 0.0
      %1201 = vmatpush1.msra.mxu0 0.0
      %1202 = vmatprep.subr.mxu0 0.0
      %1203 = vmatpush1.msra.mxu0 0.0
      %1204 = vmatprep.subr.mxu0 0.0
      %1205 = vmatpush1.msra.mxu0 0.0
      %1206 = vmatprep.subr.mxu0 0.0
      %1207 = vmatpush1.msra.mxu0 0.0
      %1208 = vmatprep.subr.mxu0 0.0
      %1209 = vmatpush1.msra.mxu0 0.0
      %1210 = vmatprep.subr.mxu0 0.0
      %1211 = vmatpush1.msra.mxu0 0.0
      %1212 = vmatprep.subr.mxu0 0.0
      %1213 = vmatpush1.msra.mxu0 0.0
      %1214 = vmatprep.subr.mxu0 0.0
      %1215 = vmatpush1.msra.mxu0 0.0
      %1216 = vmatprep.subr.mxu0 0.0
      %1217 = vmatpush1.msra.mxu0 0.0
      %1218 = vmatprep.subr.mxu0 0.0
      %1219 = vmatpush1.msra.mxu0 0.0
      %1220 = vmatprep.subr.mxu0 0.0
      %1221 = vmatpush1.msra.mxu0 0.0
      %1222 = vmatprep.subr.mxu0 0.0
      %1223 = vmatpush1.msra.mxu0 0.0
      %1224 = vmatprep.subr.mxu0 0.0
      %1225 = vmatpush1.msra.mxu0 0.0
      %1226 = vmatprep.subr.mxu0 0.0
      %1227 = vmatpush1.msra.mxu0 0.0
      %1228 = vmatprep.subr.mxu0 0.0
      %1229 = vmatpush1.msra.mxu0 0.0
      %1230 = vmatprep.subr.mxu0 0.0
      %1231 = vmatpush1.msra.mxu0 0.0
      %1232 = vmatprep.mubr.f32.mxu0 0.0
      %1233 = vmatmul.mubr.f32.gmra.mrb[0].mxu0 %v1032
      %v1234 = vpop.f32.mrb[0].mxu0
      %v1235 = vadd.f32 %v993, %v1234
      %v1236 = vpop.f32.mrb[0].mxu0
      %1237 = vmatprep.mubr.f32.mxu0 0.0
      %1238 = vmatmul.mubr.f32.gmra.mrb[0].mxu0 %v1035
      %v1239 = vpop.f32.mrb[0].mxu0
      %v1240 = vadd.f32 %v998, %v1239
      %v1241 = vpop.f32.mrb[0].mxu0
      %1242 = vmatprep.mubr.f32.mxu0 0.0
      %1243 = vmatmul.mubr.f32.gmra.mrb[0].mxu0 %v1038
      %v1244 = vpop.f32.mrb[0].mxu0
      %v1245 = vadd.f32 %v1003, %v1244
      %v1246 = vpop.f32.mrb[0].mxu0
      %1247 = vmatprep.mubr.f32.mxu0 0.0
      %1248 = vmatmul.mubr.f32.gmra.mrb[0].mxu0 %v1041
      %v1249 = vpop.f32.mrb[0].mxu0
      %v1250 = vadd.f32 %v1008, %v1249
      %v1251 = vpop.f32.mrb[0].mxu0
      %1252 = vmatprep.mubr.f32.mxu0 0.0
      %1253 = vmatmul.mubr.f32.gmra.mrb[0].mxu0 %v1044
      %v1254 = vpop.f32.mrb[0].mxu0
      %v1255 = vadd.f32 %v1013, %v1254
      %v1256 = vpop.f32.mrb[0].mxu0
      %1257 = vmatprep.mubr.f32.mxu0 0.0
      %1258 = vmatmul.mubr.f32.gmra.mrb[0].mxu0 %v1047
      %v1259 = vpop.f32.mrb[0].mxu0
      %v1260 = vadd.f32 %v1018, %v1259
      %v1261 = vpop.f32.mrb[0].mxu0
      %1262 = vmatprep.mubr.f32.mxu0 0.0
      %1263 = vmatmul.mubr.f32.gmra.mrb[0].mxu0 %v1050
      %v1264 = vpop.f32.mrb[0].mxu0
      %v1265 = vadd.f32 %v1023, %v1264
      %v1266 = vpop.f32.mrb[0].mxu0
      %1267 = vmatprep.mubr.f32.mxu0 0.0
      %1268 = vmatmul.mubr.f32.gmra.mrb[0].mxu0 %v1053
      %v1269 = vpop.f32.mrb[0].mxu0
      %v1270 = vadd.f32 %v1028, %v1269
      %v1271 = vpop.f32.mrb[0].mxu0
      %1272 = vdwg.mxu0
      %v1273 = vmax.f32 %v1122, 0.0
      %v1274 = vmax.f32 %v1124, 0.0
      %v1275 = vmax.f32 %v1235, 0.0
      %v1276 = vmax.f32 %v1128, 0.0
      %v1277 = vmax.f32 %v1130, 0.0
      %v1278 = vmax.f32 %v1240, 0.0
      %v1279 = vmax.f32 %v1134, 0.0
      %v1280 = vmax.f32 %v1136, 0.0
      %v1281 = vmax.f32 %v1245, 0.0
      %v1282 = vmax.f32 %v1140, 0.0
      %v1283 = vmax.f32 %v1142, 0.0
      %v1284 = vmax.f32 %v1250, 0.0
      %v1285 = vmax.f32 %v1146, 0.0
      %v1286 = vmax.f32 %v1148, 0.0
      %v1287 = vmax.f32 %v1255, 0.0
      %v1288 = vmax.f32 %v1152, 0.0
      %v1289 = vmax.f32 %v1154, 0.0
      %v1290 = vmax.f32 %v1260, 0.0
      %v1291 = vmax.f32 %v1158, 0.0
      %v1292 = vmax.f32 %v1160, 0.0
      %v1293 = vmax.f32 %v1265, 0.0
      %v1294 = vmax.f32 %v1164, 0.0
      %v1295 = vmax.f32 %v1166, 0.0
      %v1296 = vmax.f32 %v1270, 0.0
      %v1297 = vlaneseq
      %v1298 = vand.u32 %v1297, 127
      %v1299 = vadd.s32 %v1298, 128
      %v1300 = vadd.s32 %v1298, 256
      %s1301 = smul.u32 %s24, 384
      %v1302 = vstv %s1301
      %v1303 = vadd.s32 %v1302, %v1298
      %v1304 = vadd.s32 %v1302, %v1299
      %v1305 = vadd.s32 %v1302, %v1300
      %vm1306 = vcmp.lt.s32.totalorder %v1303, 300
      %vm1307 = vcmp.lt.s32.totalorder %v1304, 300
      %vm1308 = vcmp.lt.s32.totalorder %v1305, 300
      %v1309 = vsel %vm1306, %v1273, 0.0
      %v1310 = vsel %vm1307, %v1274, 0.0
      %v1311 = vsel %vm1308, %v1275, 0.0
      %v1312 = vsel %vm1306, %v1276, 0.0
      %v1313 = vsel %vm1307, %v1277, 0.0
      %v1314 = vsel %vm1308, %v1278, 0.0
      %v1315 = vsel %vm1306, %v1279, 0.0
      %v1316 = vsel %vm1307, %v1280, 0.0
      %v1317 = vsel %vm1308, %v1281, 0.0
      %v1318 = vsel %vm1306, %v1282, 0.0
      %v1319 = vsel %vm1307, %v1283, 0.0
      %v1320 = vsel %vm1308, %v1284, 0.0
      %v1321 = vsel %vm1306, %v1285, 0.0
      %v1322 = vsel %vm1307, %v1286, 0.0
      %v1323 = vsel %vm1308, %v1287, 0.0
      %v1324 = vsel %vm1306, %v1288, 0.0
      %v1325 = vsel %vm1307, %v1289, 0.0
      %v1326 = vsel %vm1308, %v1290, 0.0
      %v1327 = vsel %vm1306, %v1291, 0.0
      %v1328 = vsel %vm1307, %v1292, 0.0
      %v1329 = vsel %vm1308, %v1293, 0.0
      %v1330 = vsel %vm1306, %v1294, 0.0
      %v1331 = vsel %vm1307, %v1295, 0.0
      %v1332 = vsel %vm1308, %v1296, 0.0
      %v1333 = vmax.f32 %v1309, %v1310
      %v1334 = vmax.f32 %v1312, %v1313
      %v1335 = vmax.f32 %v1315, %v1316
      %v1336 = vmax.f32 %v1318, %v1319
      %v1337 = vmax.f32 %v1321, %v1322
      %v1338 = vmax.f32 %v1324, %v1325
      %v1339 = vmax.f32 %v1327, %v1328
      %v1340 = vmax.f32 %v1330, %v1331
      %v1341 = vmax.f32 %v1333, %v1311
      %v1342 = vmax.f32 %v1334, %v1314
      %v1343 = vmax.f32 %v1335, %v1317
      %v1344 = vmax.f32 %v1336, %v1320
      %v1345 = vmax.f32 %v1337, %v1323
      %v1346 = vmax.f32 %v1338, %v1326
      %v1347 = vmax.f32 %v1339, %v1329
      %v1348 = vmax.f32 %v1340, %v1332
      %p1349 = scmp.eq.s32.totalorder %s24, 0
      // Predicated region
      $region53: #{pointnet_feat_forward.3} parent=51 // pred_check
        %p1350 = pneg %p1349
      $region54: #{pointnet_feat_forward.3} parent=51 // pred_check_branch
        %1352 = sbr.rel (%p1350) target = $region56
      $region55: #{pointnet_feat_forward.3} parent=51 // pred_region
        %1353 = vst [vmem:[#allocation2] sm:$0xff] %v1341
        %1354 = vst [vmem:[#allocation2 + $0x8] sm:$0xff] %v1342
        %1355 = vst [vmem:[#allocation2 + $0x10] sm:$0xff] %v1343
        %1356 = vst [vmem:[#allocation2 + $0x18] sm:$0xff] %v1344
        %1357 = vst [vmem:[#allocation2 + $0x20] sm:$0xff] %v1345
        %1358 = vst [vmem:[#allocation2 + $0x28] sm:$0xff] %v1346
        %1359 = vst [vmem:[#allocation2 + $0x30] sm:$0xff] %v1347
        %1360 = vst [vmem:[#allocation2 + $0x38] sm:$0xff] %v1348
      $region56: #{pointnet_feat_forward.3} parent=51 // pred_fallthru
        _
      %p1361 = scmp.ne.s32.totalorder %s24, 0
      // Predicated region
      $region57: #{pointnet_feat_forward.3} parent=51 // pred_check
        %p1362 = pneg %p1361
      $region58: #{pointnet_feat_forward.3} parent=51 // pred_check_branch
        %1364 = sbr.rel (%p1362) target = $region60
      $region59: #{pointnet_feat_forward.3} parent=51 // pred_region
        %v1365 = vld [vmem:[#allocation2] sm:$0xff]
        %v1366 = vld [vmem:[#allocation2 + $0x8] sm:$0xff]
        %v1367 = vld [vmem:[#allocation2 + $0x10] sm:$0xff]
        %v1368 = vld [vmem:[#allocation2 + $0x18] sm:$0xff]
        %v1369 = vld [vmem:[#allocation2 + $0x20] sm:$0xff]
        %v1370 = vld [vmem:[#allocation2 + $0x28] sm:$0xff]
        %v1371 = vld [vmem:[#allocation2 + $0x30] sm:$0xff]
        %v1372 = vld [vmem:[#allocation2 + $0x38] sm:$0xff]
        %v1373 = vmax.f32 %v1365, %v1341
        %v1374 = vmax.f32 %v1366, %v1342
        %v1375 = vmax.f32 %v1367, %v1343
        %v1376 = vmax.f32 %v1368, %v1344
        %v1377 = vmax.f32 %v1369, %v1345
        %v1378 = vmax.f32 %v1370, %v1346
        %v1379 = vmax.f32 %v1371, %v1347
        %v1380 = vmax.f32 %v1372, %v1348
        %1381 = vst [vmem:[#allocation2] sm:$0xff] %v1373
        %1382 = vst [vmem:[#allocation2 + $0x8] sm:$0xff] %v1374
        %1383 = vst [vmem:[#allocation2 + $0x10] sm:$0xff] %v1375
        %1384 = vst [vmem:[#allocation2 + $0x18] sm:$0xff] %v1376
        %1385 = vst [vmem:[#allocation2 + $0x20] sm:$0xff] %v1377
        %1386 = vst [vmem:[#allocation2 + $0x28] sm:$0xff] %v1378
        %1387 = vst [vmem:[#allocation2 + $0x30] sm:$0xff] %v1379
        %1388 = vst [vmem:[#allocation2 + $0x38] sm:$0xff] %v1380
      $region60: #{pointnet_feat_forward.3} parent=51 // pred_fallthru
        _
      // Predicated region
      $region61: #{pointnet_feat_forward.3} parent=51 // pred_check
        %p1389 = pneg %p1349
      $region62: #{pointnet_feat_forward.3} parent=51 // pred_check_branch
        %1391 = sbr.rel (%p1389) target = $region64
      $region63: #{pointnet_feat_forward.3} parent=51 // pred_region
        %v1392 = vld [vmem:[#allocation2] sm:$0xff]
        %v1393 = vld [vmem:[#allocation2 + $0x8] sm:$0xff]
        %v1394 = vld [vmem:[#allocation2 + $0x10] sm:$0xff]
        %v1395 = vld [vmem:[#allocation2 + $0x18] sm:$0xff]
        %v1396 = vld [vmem:[#allocation2 + $0x20] sm:$0xff]
        %v1397 = vld [vmem:[#allocation2 + $0x28] sm:$0xff]
        %v1398 = vld [vmem:[#allocation2 + $0x30] sm:$0xff]
        %v1399 = vld [vmem:[#allocation2 + $0x38] sm:$0xff]
        %1400 = vmax.xlane.f32.xlu0 %v1392
        %v1401 = vpop.xlane.xlu0 %1400
        %1402 = vmax.xlane.f32.xlu0 %v1393
        %v1403 = vpop.xlane.xlu0 %1402
        %1404 = vmax.xlane.f32.xlu0 %v1394
        %v1405 = vpop.xlane.xlu0 %1404
        %1406 = vmax.xlane.f32.xlu0 %v1395
        %v1407 = vpop.xlane.xlu0 %1406
        %1408 = vmax.xlane.f32.xlu0 %v1396
        %v1409 = vpop.xlane.xlu0 %1408
        %1410 = vmax.xlane.f32.xlu0 %v1397
        %v1411 = vpop.xlane.xlu0 %1410
        %1412 = vmax.xlane.f32.xlu0 %v1398
        %v1413 = vpop.xlane.xlu0 %1412
        %1414 = vmax.xlane.f32.xlu0 %v1399
        %v1415 = vpop.xlane.xlu0 %1414
        %vm1416 = vcmask 7168
        %1417 = vst.msk [vmem:[%s373] sm:$0xff] %vm1416, %v1401
        %1418 = vst.msk [vmem:[%s373 + $0x8] sm:$0xff] %vm1416, %v1403
        %1419 = vst.msk [vmem:[%s373 + $0x10] sm:$0xff] %vm1416, %v1405
        %1420 = vst.msk [vmem:[%s373 + $0x18] sm:$0xff] %vm1416, %v1407
        %1421 = vst.msk [vmem:[%s373 + $0x20] sm:$0xff] %vm1416, %v1409
        %1422 = vst.msk [vmem:[%s373 + $0x28] sm:$0xff] %vm1416, %v1411
        %1423 = vst.msk [vmem:[%s373 + $0x30] sm:$0xff] %vm1416, %v1413
        %1424 = vst.msk [vmem:[%s373 + $0x38] sm:$0xff] %vm1416, %v1415
      $region64: #{pointnet_feat_forward.3} parent=51 // pred_fallthru
        _
      %p1425 = scmp.lt.s32.totalorder %s23, 1
      %s1426 = scalar_select %p1425, %s23, 1
      %s1427 = smul.addr %s1426, 8
      %s1428 = smul.addr %s1427, 8
      %s1429 = scalar_lea.vmem %s8, %s1428
      // Predicated region
      $region65: #{pointnet_feat_forward.3} parent=51 // pred_check
        %p1430 = pneg %p234
      $region66: #{pointnet_feat_forward.3} parent=51 // pred_check_branch
        %1432 = sbr.rel (%p1430) target = $region68
      $region67: #{pointnet_feat_forward.3} parent=51 // pred_region
        _
      $region68: #{pointnet_feat_forward.3} parent=51 // pred_fallthru
        _
    $region52: #{pointnet_feat_forward.3} parent=5 // pred_fallthru
      _
    %p1433 = scmp.le.s32.totalorder 2, %s14
    // Predicated region
    $region69: #{pointnet_feat_forward.3} parent=5 // pred_check
      %p1434 = pneg %p1433
    $region70: #{pointnet_feat_forward.3} parent=5 // pred_check_branch
      %1436 = sbr.rel (%p1434) target = $region72
    $region71: #{pointnet_feat_forward.3} parent=5 // pred_region
      %s1437 = ssub.s32 %s14, 2
      // Predicated region
      $region73: #{pointnet_feat_forward.3} parent=71 // pred_check
        %p1438 = pneg %p240
      $region74: #{pointnet_feat_forward.3} parent=71 // pred_check_branch
        %1440 = sbr.rel (%p1438) target = $region76
      $region75: #{pointnet_feat_forward.3} parent=71 // pred_region
        %p1441 = scmp.lt.s32.totalorder %s25, 1
        %s1442 = scalar_select %p1441, %s25, 1
        %s1443 = smul.addr %s1442, 8
        %s1444 = smul.addr %s1443, 8
        %s1445 = scalar_lea.vmem %s8, %s1444
      $region76: #{pointnet_feat_forward.3} parent=71 // pred_fallthru
        _
    $region72: #{pointnet_feat_forward.3} parent=5 // pred_fallthru
      _
  $region6: #{pointnet_feat_forward.3} parent=0 // loop_footer
    %s18 = sadd.s32 1, %s14
  $region7: #{pointnet_feat_forward.3} parent=0 // loop_footer_branch
    %13 = sbr.rel target = $region3
  $region8: #{pointnet_feat_forward.3} parent=0 // loop_exit
    _

</llo_original>
